<compile_context>
chip_gen: v7x
topology: tpu7x:2x2x1
jax: 0.10.0
libtpu: 0.0.40
codegen_flags: <defaults>
</compile_context>

<pallas_src>
import functools

import jax
import jax.numpy as jnp
from jax.experimental import pallas as pl
from jax.experimental.pallas import tpu as pltpu


def _round_up(x, m):
    return (x + m - 1) // m * m


def _choose_tm(n8, target):
    """Largest multiple-of-8 divisor of n8 that is <= target, preferring >= 2
    (and even) grid steps so v7x can shard the grid across both TensorCores."""
    limit = min(target, n8)
    if n8 >= 16:                       # never collapse the grid to a single step
        limit = min(limit, n8 // 2)
    limit = max(8, limit - limit % 8)
    tm = 8
    for cand in range(limit, 7, -8):
        if n8 % cand == 0:
            tm = cand
            break
    steps = n8 // tm
    if steps > 1 and steps % 2 == 1 and tm % 16 == 0 and tm >= 128:
        tm //= 2                       # even step count -> balanced dual-TC split
    return tm


def residual_block_kernel(x_ref, w1_ref, c1_ref, w2_ref, c2_ref, o_ref):
    # Linear1 (BN1 scale folded into weight columns) + folded bias/shift + ReLU.
    # Dropout = identity in eval mode.
    h = jnp.dot(x_ref[...].astype(jnp.bfloat16), w1_ref[...],
                preferred_element_type=jnp.float32)               # (TM, d) f32
    h = jnp.maximum(h + c1_ref[...], 0.0)

    # Linear2 (BN2 scale folded) + folded bias/shift.
    y = jnp.dot(h.astype(jnp.bfloat16), w2_ref[...],
                preferred_element_type=jnp.float32)               # (TM, d) f32

    # Skip connection + final ReLU. Re-read x from VMEM instead of carrying the
    # full f32 tile across both matmuls (keeps vreg pressure low).
    o_ref[...] = jnp.maximum(y + c2_ref[...] + x_ref[...], 0.0).astype(o_ref.dtype)


@functools.partial(jax.jit,
                   static_argnames=("tm", "out_dtype", "single_buffer_weights"))
def _residual_block(x, params, *, tm, out_dtype, single_buffer_weights):
    N, d = x.shape

    # Align the batch to the 8-sublane granule only (<= 7 padded rows; avoids a
    # full host-side pad copy for awkward N).
    N8 = _round_up(max(N, 8), 8)
    if N8 != N:
        x = jnp.pad(x, ((0, N8 - N), (0, 0)))

    tm = _choose_tm(N8, tm)
    grid = (N8 // tm,)

    # VMEM budget: weights/vectors resident (single- or double-buffered),
    # x/out tiles double-buffered by the pipeline.
    d_pad = _round_up(d, 128)
    wbuf = 1 if single_buffer_weights else 2
    wbytes = wbuf * 2 * d * d_pad * 2                      # two bf16 weight mats
    vecbytes = wbuf * 2 * 8 * d_pad * 4                    # c1, c2 (padded rows)
    iobytes = 2 * tm * d_pad * (4 + jnp.dtype(out_dtype).itemsize)
    budget = wbytes + vecbytes + iobytes + (4 << 20)
    try:
        cap = pltpu.get_tpu_info().vmem_capacity_bytes     # 64 MiB/TC on v7x
    except Exception:
        cap = 64 << 20                                     # conservative default
    vmem_limit = int(min(max(budget, 16 << 20), cap - (8 << 20)))

    cost = pl.CostEstimate(
        flops=4 * N8 * d * d,                              # two (tm,d)x(d,d) matmuls
        bytes_accessed=(2 * d * d * 2 + 2 * d * 4
                        + N8 * d * 4
                        + N8 * d * jnp.dtype(out_dtype).itemsize),
        transcendentals=0,
    )

    if single_buffer_weights:
        # Constant index_map -> the block never changes; no need to double-buffer.
        resident = lambda shape: pl.BlockSpec(shape, lambda i: (0, 0),
                                              pipeline_mode=pl.Buffered(1))
    else:
        resident = lambda shape: pl.BlockSpec(shape, lambda i: (0, 0))

    out = pl.pallas_call(
        residual_block_kernel,
        out_shape=jax.ShapeDtypeStruct((N8, d), out_dtype),
        grid=grid,
        in_specs=[
            pl.BlockSpec((tm, d), lambda i: (i, 0)),       # x tile (streamed)
            resident((d, d)),                              # W1^T * a1  (bf16)
            resident((1, d)),                              # c1 = a1*(b1-rm1)+beta1
            resident((d, d)),                              # W2^T * a2  (bf16)
            resident((1, d)),                              # c2 = a2*(b2-rm2)+beta2
        ],
        out_specs=pl.BlockSpec((tm, d), lambda i: (i, 0)),
        compiler_params=pltpu.CompilerParams(
            dimension_semantics=("parallel",),
            vmem_limit_bytes=vmem_limit),
        cost_estimate=cost,
    )(x, params["w1t"], params["c1"], params["w2t"], params["c2"])

    return out[:N] if N8 != N else out


def residual_block(x, params, *, tm=512, out_dtype=jnp.float32):
    """x: (N, d) float32. params: dict of folded kernel parameters."""
    try:
        return _residual_block(x, params, tm=tm, out_dtype=out_dtype,
                               single_buffer_weights=True)
    except Exception:
        # Fallback for toolchains that reject pl.Buffered(1): default
        # double-buffered resident blocks (costs one extra weight copy in VMEM).
        return _residual_block(x, params, tm=tm, out_dtype=out_dtype,
                               single_buffer_weights=False)


def make_params(key, d, eps=1e-5):
    """Deterministic synthetic parameters; fold Linear bias + BN into the weights."""
    ks = jax.random.split(key, 12)
    init = lambda k, shape, s=0.1: s * jax.random.normal(k, shape, jnp.float32)

    # Layer 1: Linear(d, d) + BatchNorm1d(d)
    W1 = init(ks[0], (d, d))
    b1 = init(ks[1], (d,))
    g1 = 1.0 + init(ks[2], (d,))
    beta1 = init(ks[3], (d,))
    rm1 = init(ks[4], (d,))
    rv1 = 1.0 + 0.1 * jax.random.uniform(ks[5], (d,), jnp.float32)

    # Layer 2: Linear(d, d) + BatchNorm1d(d)
    W2 = init(ks[6], (d, d))
    b2 = init(ks[7], (d,))
    g2 = 1.0 + init(ks[8], (d,))
    beta2 = init(ks[9], (d,))
    rm2 = init(ks[10], (d,))
    rv2 = 1.0 + 0.1 * jax.random.uniform(ks[11], (d,), jnp.float32)

    # BN(z) = g*(z - rm)/sqrt(rv+eps) + beta == a*z + shift, with a = g/sqrt(rv+eps).
    # Fold `a` into the weight columns and the Linear bias into the shift.
    a1 = g1 / jnp.sqrt(rv1 + eps)
    c1 = a1 * (b1 - rm1) + beta1
    a2 = g2 / jnp.sqrt(rv2 + eps)
    c2 = a2 * (b2 - rm2) + beta2

    return {
        "w1t": (W1.T * a1[None, :]).astype(jnp.bfloat16),
        "c1": c1.reshape(1, d).astype(jnp.float32),
        "w2t": (W2.T * a2[None, :]).astype(jnp.bfloat16),
        "c2": c2.reshape(1, d).astype(jnp.float32),
    }


def residual_block_ref(x, params):
    """Pure-JAX reference with identical math (bf16 MXU inputs, f32 accumulate)."""
    h = jnp.dot(x.astype(jnp.bfloat16), params["w1t"],
                preferred_element_type=jnp.float32)
    h = jnp.maximum(h + params["c1"], 0.0)
    y = jnp.dot(h.astype(jnp.bfloat16), params["w2t"],
                preferred_element_type=jnp.float32)
    return jnp.maximum(y + params["c2"] + x, 0.0)


if __name__ == "__main__":
    N, d = 512, 256   # batch, hidden size (small, tile-aligned, MXU-friendly)
    key = jax.random.PRNGKey(0)
    kx, kp = jax.random.split(key)
    x = jax.random.normal(kx, (N, d), jnp.float32)
    params = make_params(kp, d)

    out = residual_block(x, params, tm=512)   # _choose_tm -> tm=256, grid=(2,)
    out = jax.block_until_ready(out)

    ref = residual_block_ref(x, params)
    assert out.shape == (N, d)
    assert jnp.allclose(out, ref, atol=1e-3, rtol=1e-3), "mismatch vs reference"
    print("KERNEL_OK")
</pallas_src>

<mosaic_0001>
module attributes {stable_mosaic.version = 11 : i64} {
  func.func @residual_block_kernel(%arg0: i32, %arg1: memref<256x256xf32, #tpu.memory_space<vmem>>, %arg2: memref<256x256xbf16, #tpu.memory_space<vmem>>, %arg3: memref<1x256xf32, #tpu.memory_space<vmem>>, %arg4: memref<256x256xbf16, #tpu.memory_space<vmem>>, %arg5: memref<1x256xf32, #tpu.memory_space<vmem>>, %arg6: memref<256x256xf32, #tpu.memory_space<vmem>>) attributes {dimension_semantics = [#tpu.dimension_semantics<parallel>], iteration_bounds = array<i64: 2>, scalar_prefetch = 0 : i64, scratch_operands = 0 : i64, tpu.core_type = #tpu.core_type<tc>, window_params = [{transform_indices = @transform_0, window_bounds = array<i64: 256, 256>}, {pipeline_mode = #tpu.pipeline_mode<synchronous>, transform_indices = @transform_1, window_bounds = array<i64: 256, 256>}, {pipeline_mode = #tpu.pipeline_mode<synchronous>, transform_indices = @transform_2, window_bounds = array<i64: 1, 256>}, {pipeline_mode = #tpu.pipeline_mode<synchronous>, transform_indices = @transform_3, window_bounds = array<i64: 256, 256>}, {pipeline_mode = #tpu.pipeline_mode<synchronous>, transform_indices = @transform_4, window_bounds = array<i64: 1, 256>}, {transform_indices = @transform_5, window_bounds = array<i64: 256, 256>}]} {
    %c0 = arith.constant 0 : index
    %c0_0 = arith.constant 0 : index
    %0 = vector.load %arg1[%c0, %c0_0] : memref<256x256xf32, #tpu.memory_space<vmem>>, vector<256x256xf32>
    %1 = arith.truncf %0 : vector<256x256xf32> to vector<256x256xbf16>
    %c0_1 = arith.constant 0 : index
    %c0_2 = arith.constant 0 : index
    %2 = vector.load %arg2[%c0_1, %c0_2] : memref<256x256xbf16, #tpu.memory_space<vmem>>, vector<256x256xbf16>
    %cst = arith.constant dense<0.000000e+00> : vector<256x256xf32>
    %3 = tpu.matmul %1, %2, %cst {dimension_numbers = #tpu.dot_dimension_numbers<[1], [0], [0], [1], [0, 0, 1, 1], [], []>} : vector<256x256xbf16>, vector<256x256xbf16>, vector<256x256xf32> -> vector<256x256xf32>
    %c0_3 = arith.constant 0 : index
    %c0_4 = arith.constant 0 : index
    %4 = vector.load %arg3[%c0_3, %c0_4] : memref<1x256xf32, #tpu.memory_space<vmem>>, vector<1x256xf32>
    %5 = vector.broadcast %4 : vector<1x256xf32> to vector<256x256xf32>
    %6 = arith.addf %3, %5 : vector<256x256xf32>
    %cst_5 = arith.constant 0.000000e+00 : f32
    %7 = vector.broadcast %cst_5 : f32 to vector<256x256xf32>
    %8 = arith.maximumf %6, %7 : vector<256x256xf32>
    %9 = arith.truncf %8 : vector<256x256xf32> to vector<256x256xbf16>
    %c0_6 = arith.constant 0 : index
    %c0_7 = arith.constant 0 : index
    %10 = vector.load %arg4[%c0_6, %c0_7] : memref<256x256xbf16, #tpu.memory_space<vmem>>, vector<256x256xbf16>
    %cst_8 = arith.constant dense<0.000000e+00> : vector<256x256xf32>
    %11 = tpu.matmul %9, %10, %cst_8 {dimension_numbers = #tpu.dot_dimension_numbers<[1], [0], [0], [1], [0, 0, 1, 1], [], []>} : vector<256x256xbf16>, vector<256x256xbf16>, vector<256x256xf32> -> vector<256x256xf32>
    %c0_9 = arith.constant 0 : index
    %c0_10 = arith.constant 0 : index
    %12 = vector.load %arg5[%c0_9, %c0_10] : memref<1x256xf32, #tpu.memory_space<vmem>>, vector<1x256xf32>
    %13 = vector.broadcast %12 : vector<1x256xf32> to vector<256x256xf32>
    %14 = arith.addf %11, %13 : vector<256x256xf32>
    %c0_11 = arith.constant 0 : index
    %c0_12 = arith.constant 0 : index
    %15 = vector.load %arg1[%c0_11, %c0_12] : memref<256x256xf32, #tpu.memory_space<vmem>>, vector<256x256xf32>
    %16 = arith.addf %14, %15 : vector<256x256xf32>
    %cst_13 = arith.constant 0.000000e+00 : f32
    %17 = vector.broadcast %cst_13 : f32 to vector<256x256xf32>
    %18 = arith.maximumf %16, %17 : vector<256x256xf32>
    %c0_14 = arith.constant 0 : index
    %c0_15 = arith.constant 0 : index
    %19 = vector.load %arg6[%c0_14, %c0_15] : memref<256x256xf32, #tpu.memory_space<vmem>>, vector<256x256xf32>
    tpu.vector_store %arg6[%c0_14, %c0_15], %18 {strides = array<i32>} : memref<256x256xf32, #tpu.memory_space<vmem>>, vector<256x256xf32>,
    return
  }
  func.func @transform_0(%arg0: i32) -> (i32, i32) {
    %c0_i32 = arith.constant 0 : i32
    %c0_i32_0 = arith.constant 0 : i32
    return %arg0, %c0_i32 : i32, i32
  }
  func.func @transform_1(%arg0: i32) -> (i32, i32) {
    %c0_i32 = arith.constant 0 : i32
    %c0_i32_0 = arith.constant 0 : i32
    %c0_i32_1 = arith.constant 0 : i32
    return %c0_i32, %c0_i32_0 : i32, i32
  }
  func.func @transform_2(%arg0: i32) -> (i32, i32) {
    %c0_i32 = arith.constant 0 : i32
    %c0_i32_0 = arith.constant 0 : i32
    %c0_i32_1 = arith.constant 0 : i32
    return %c0_i32, %c0_i32_0 : i32, i32
  }
  func.func @transform_3(%arg0: i32) -> (i32, i32) {
    %c0_i32 = arith.constant 0 : i32
    %c0_i32_0 = arith.constant 0 : i32
    %c0_i32_1 = arith.constant 0 : i32
    return %c0_i32, %c0_i32_0 : i32, i32
  }
  func.func @transform_4(%arg0: i32) -> (i32, i32) {
    %c0_i32 = arith.constant 0 : i32
    %c0_i32_0 = arith.constant 0 : i32
    %c0_i32_1 = arith.constant 0 : i32
    return %c0_i32, %c0_i32_0 : i32, i32
  }
  func.func @transform_5(%arg0: i32) -> (i32, i32) {
    %c0_i32 = arith.constant 0 : i32
    %c0_i32_0 = arith.constant 0 : i32
    return %arg0, %c0_i32 : i32, i32
  }
}

module attributes {stable_mosaic.version = 11 : i64} {
  func.func @residual_block_kernel(%arg0: i32, %arg1: memref<256x256xf32, #tpu.memory_space<vmem>>, %arg2: memref<256x256xbf16, #tpu.memory_space<vmem>>, %arg3: memref<1x256xf32, #tpu.memory_space<vmem>>, %arg4: memref<256x256xbf16, #tpu.memory_space<vmem>>, %arg5: memref<1x256xf32, #tpu.memory_space<vmem>>, %arg6: memref<256x256xf32, #tpu.memory_space<vmem>>) attributes {dimension_semantics = [#tpu.dimension_semantics<parallel>], iteration_bounds = array<i64: 2>, scalar_prefetch = 0 : i64, scratch_operands = 0 : i64, tpu.core_type = #tpu.core_type<tc>, window_params = [{transform_indices = @transform_0, window_bounds = array<i64: 256, 256>}, {pipeline_mode = #tpu.pipeline_mode<synchronous>, transform_indices = @transform_1, window_bounds = array<i64: 256, 256>}, {pipeline_mode = #tpu.pipeline_mode<synchronous>, transform_indices = @transform_2, window_bounds = array<i64: 1, 256>}, {pipeline_mode = #tpu.pipeline_mode<synchronous>, transform_indices = @transform_3, window_bounds = array<i64: 256, 256>}, {pipeline_mode = #tpu.pipeline_mode<synchronous>, transform_indices = @transform_4, window_bounds = array<i64: 1, 256>}, {transform_indices = @transform_5, window_bounds = array<i64: 256, 256>}]} {
    %c0 = arith.constant 0 : index
    %c0_0 = arith.constant 0 : index
    %0 = vector.load %arg1[%c0, %c0_0] : memref<256x256xf32, #tpu.memory_space<vmem>>, vector<256x256xf32>
    %1 = arith.truncf %0 : vector<256x256xf32> to vector<256x256xbf16>
    %c0_1 = arith.constant 0 : index
    %c0_2 = arith.constant 0 : index
    %2 = vector.load %arg2[%c0_1, %c0_2] : memref<256x256xbf16, #tpu.memory_space<vmem>>, vector<256x256xbf16>
    %cst = arith.constant dense<0.000000e+00> : vector<256x256xf32>
    %3 = tpu.matmul %1, %2, %cst {dimension_numbers = #tpu.dot_dimension_numbers<[1], [0], [0], [1], [0, 0, 1, 1], [], []>} : vector<256x256xbf16>, vector<256x256xbf16>, vector<256x256xf32> -> vector<256x256xf32>
    %c0_3 = arith.constant 0 : index
    %c0_4 = arith.constant 0 : index
    %4 = vector.load %arg3[%c0_3, %c0_4] : memref<1x256xf32, #tpu.memory_space<vmem>>, vector<1x256xf32>
    %5 = vector.broadcast %4 : vector<1x256xf32> to vector<256x256xf32>
    %6 = arith.addf %3, %5 : vector<256x256xf32>
    %cst_5 = arith.constant 0.000000e+00 : f32
    %7 = vector.broadcast %cst_5 : f32 to vector<256x256xf32>
    %8 = arith.maximumf %6, %7 : vector<256x256xf32>
    %9 = arith.truncf %8 : vector<256x256xf32> to vector<256x256xbf16>
    %c0_6 = arith.constant 0 : index
    %c0_7 = arith.constant 0 : index
    %10 = vector.load %arg4[%c0_6, %c0_7] : memref<256x256xbf16, #tpu.memory_space<vmem>>, vector<256x256xbf16>
    %cst_8 = arith.constant dense<0.000000e+00> : vector<256x256xf32>
    %11 = tpu.matmul %9, %10, %cst_8 {dimension_numbers = #tpu.dot_dimension_numbers<[1], [0], [0], [1], [0, 0, 1, 1], [], []>} : vector<256x256xbf16>, vector<256x256xbf16>, vector<256x256xf32> -> vector<256x256xf32>
    %c0_9 = arith.constant 0 : index
    %c0_10 = arith.constant 0 : index
    %12 = vector.load %arg5[%c0_9, %c0_10] : memref<1x256xf32, #tpu.memory_space<vmem>>, vector<1x256xf32>
    %13 = vector.broadcast %12 : vector<1x256xf32> to vector<256x256xf32>
    %14 = arith.addf %11, %13 : vector<256x256xf32>
    %c0_11 = arith.constant 0 : index
    %c0_12 = arith.constant 0 : index
    %15 = vector.load %arg1[%c0_11, %c0_12] : memref<256x256xf32, #tpu.memory_space<vmem>>, vector<256x256xf32>
    %16 = arith.addf %14, %15 : vector<256x256xf32>
    %cst_13 = arith.constant 0.000000e+00 : f32
    %17 = vector.broadcast %cst_13 : f32 to vector<256x256xf32>
    %18 = arith.maximumf %16, %17 : vector<256x256xf32>
    %c0_14 = arith.constant 0 : index
    %c0_15 = arith.constant 0 : index
    %19 = vector.load %arg6[%c0_14, %c0_15] : memref<256x256xf32, #tpu.memory_space<vmem>>, vector<256x256xf32>
    tpu.vector_store %arg6[%c0_14, %c0_15], %18 {strides = array<i32>} : memref<256x256xf32, #tpu.memory_space<vmem>>, vector<256x256xf32>,
    return
  }
  func.func @transform_0(%arg0: i32) -> (i32, i32) {
    %c0_i32 = arith.constant 0 : i32
    %c0_i32_0 = arith.constant 0 : i32
    return %arg0, %c0_i32 : i32, i32
  }
  func.func @transform_1(%arg0: i32) -> (i32, i32) {
    %c0_i32 = arith.constant 0 : i32
    %c0_i32_0 = arith.constant 0 : i32
    %c0_i32_1 = arith.constant 0 : i32
    return %c0_i32, %c0_i32_0 : i32, i32
  }
  func.func @transform_2(%arg0: i32) -> (i32, i32) {
    %c0_i32 = arith.constant 0 : i32
    %c0_i32_0 = arith.constant 0 : i32
    %c0_i32_1 = arith.constant 0 : i32
    return %c0_i32, %c0_i32_0 : i32, i32
  }
  func.func @transform_3(%arg0: i32) -> (i32, i32) {
    %c0_i32 = arith.constant 0 : i32
    %c0_i32_0 = arith.constant 0 : i32
    %c0_i32_1 = arith.constant 0 : i32
    return %c0_i32, %c0_i32_0 : i32, i32
  }
  func.func @transform_4(%arg0: i32) -> (i32, i32) {
    %c0_i32 = arith.constant 0 : i32
    %c0_i32_0 = arith.constant 0 : i32
    %c0_i32_1 = arith.constant 0 : i32
    return %c0_i32, %c0_i32_0 : i32, i32
  }
  func.func @transform_5(%arg0: i32) -> (i32, i32) {
    %c0_i32 = arith.constant 0 : i32
    %c0_i32_0 = arith.constant 0 : i32
    return %arg0, %c0_i32 : i32, i32
  }
}

</mosaic_0001>

<llo_original>
// kernel: _residual_block.1
$region0: #{_residual_block.1}
  #allocation0 [shape = 'u32[]', space=smem, size = 0x4, offset = 0x4, fixed_abs, tag = 'smem constant byte address 0x4 - core index']
  #allocation1 [shape = 'u32[144,128]{1,0:T(1,128)}', space=vmem, size = 0x12000, scoped, tag = 'internal scratch']
  %s0 = inlined_call_operand.hbm [shape: f32[512,256], index: 0, kind: input, shape index: {}]
  %s1 = inlined_call_operand.hbm [shape: bf16[256,256], index: 1, kind: input, shape index: {}]
  %s2 = inlined_call_operand.vmem [shape: f32[1,256], index: 2, kind: input, shape index: {}]
  %s3 = inlined_call_operand.hbm [shape: bf16[256,256], index: 3, kind: input, shape index: {}]
  %s4 = inlined_call_operand.vmem [shape: f32[1,256], index: 4, kind: input, shape index: {}]
  %s5 = inlined_call_operand.hbm [shape: f32[512,256], index: 5, kind: output, shape index: {}]
  %s6 = sld [smem:[#allocation0]]
  $region65: #{_residual_block.1} parent=0
    _
  %s8 = ssub.s32 1, %s6
  %s9 = scalar_select 0, %s8, %s6
  $region1: #{_residual_block.1} parent=0
    #allocation2 [shape = 'u8[524288]{0}', space=vmem, size = 0x80000, scoped, tag = 'input window, operand 0']
    #allocation3 [shape = 's32[2]{0}', space=sflag, size = 0x8, scoped, tag = 'scoped memory for _residual_block.1']
    #allocation4 [shape = 's32[2]{0}', space=sflag, size = 0x8, scoped, tag = 'scoped memory for _residual_block.1']
    #allocation5 [shape = 'u8[131072]{0}', space=vmem, size = 0x20000, scoped, tag = 'input window, operand 1, single buffered']
    #allocation6 [shape = 's32[1]{0}', space=sflag, size = 0x4, scoped, tag = 'scoped memory for _residual_block.1']
    #allocation7 [shape = 'u8[131072]{0}', space=vmem, size = 0x20000, scoped, tag = 'input window, operand 3, single buffered']
    #allocation8 [shape = 'u8[524288]{0}', space=vmem, size = 0x80000, scoped, tag = 'output window, operand 0']
    %10 = vsyncpa [#allocation3], 0
    %s11 = scalar_lea.sflag [#allocation3], 1
    %12 = vsyncpa %s11, 0
    %13 = vsyncpa [#allocation6], 0
    %14 = vsyncpa [#allocation4], 0
    %s15 = scalar_lea.sflag [#allocation4], 1
    %16 = vsyncpa %s15, 0
    loop: start=0, step=1, limit=4
    $region2: #{_residual_block.1} parent=1 // loop_pre_header
      _
    $region3: #{_residual_block.1} parent=1 // loop_header
      %s18 = sphi 0, %s22
      %p19 = scmp.ge.s32.totalorder %s18, 4
      %s28 = sphi 0, %s30
      %s31 = sphi 0, %s28
      %s32 = sphi 0, %s31
      %s48 = sphi 0, %s32
      %s52 = sphi 0, %s52
      %s54 = sphi 0, %s52
      %s55 = sphi 0, %s54
      %s69 = sphi 0, %s55
      %s73 = sphi 0, %s73
      %s75 = sphi 0, %s73
      %s76 = sphi 0, %s75
      %s90 = sphi 0, %s76
      %s94 = sphi 0, %s94
      %s96 = sphi 0, %s94
      %s97 = sphi 0, %s96
      %s111 = sphi 0, %s97
      %s115 = sphi 0, %s115
      %s117 = sphi 0, %s115
      %s118 = sphi 0, %s117
      %s132 = sphi 0, %s118
      %s138 = sphi 0, %s140
      %s141 = sphi 0, %s138
      %s142 = sphi 0, %s141
      %s158 = sphi 0, %s142
    $region4: #{_residual_block.1} parent=1 // loop_header_branch
      %21 = sbr.rel (%p19) target = $region8
    $region5: #{_residual_block.1} parent=1 // loop_body
      %s23 = ssub.s32 %s18, 1
      %s24 = ssub.s32 %s18, 2
      %s25 = sadd.s32 %s18, 1
      %s26 = ssub.s32 %s18, %s25
      %p27 = scmp.eq.s32.totalorder %s26, 0
      %s29 = sadd.s32 %s28, 1
      %s30 = scalar_select %p27, %s28, %s29
      %p33 = pneg %p27
      %p34 = scmp.eq.s32.totalorder %s18, 1
      %p35 = por %p33, %p34
      %p36 = scmp.ne.s32.totalorder %s28, %s31
      %p37 = scmp.eq.s32.totalorder %s18, 0
      %p38 = por %p36, %p37
      %p39 = scmp.ne.s32.totalorder %s28, %s31
      %p40 = scmp.eq.s32.totalorder %s23, 1
      %p41 = por %p39, %p40
      %p42 = scmp.ne.s32.totalorder %s31, %s32
      %p43 = scmp.eq.s32.totalorder %s23, 0
      %p44 = por %p42, %p43
      %p45 = scmp.ne.s32.totalorder %s31, %s32
      %p46 = scmp.eq.s32.totalorder %s24, 1
      %p47 = por %p45, %p46
      %p49 = scmp.ne.s32.totalorder %s32, %s48
      %p50 = scmp.eq.s32.totalorder %s24, 0
      %p51 = por %p49, %p50
      %s53 = sadd.s32 %s52, 1
      %p56 = scmp.eq.s32.totalorder %s18, 1
      %p57 = scmp.ne.s32.totalorder %s52, %s54
      %p58 = scmp.eq.s32.totalorder %s18, 0
      %p59 = por %p57, %p58
      %p60 = scmp.ne.s32.totalorder %s52, %s54
      %p61 = scmp.eq.s32.totalorder %s23, 1
      %p62 = por %p60, %p61
      %p63 = scmp.ne.s32.totalorder %s54, %s55
      %p64 = scmp.eq.s32.totalorder %s23, 0
      %p65 = por %p63, %p64
      %p66 = scmp.ne.s32.totalorder %s54, %s55
      %p67 = scmp.eq.s32.totalorder %s24, 1
      %p68 = por %p66, %p67
      %p70 = scmp.ne.s32.totalorder %s55, %s69
      %p71 = scmp.eq.s32.totalorder %s24, 0
      %p72 = por %p70, %p71
      %s74 = sadd.s32 %s73, 1
      %p77 = scmp.eq.s32.totalorder %s18, 1
      %p78 = scmp.ne.s32.totalorder %s73, %s75
      %p79 = scmp.eq.s32.totalorder %s18, 0
      %p80 = por %p78, %p79
      %p81 = scmp.ne.s32.totalorder %s73, %s75
      %p82 = scmp.eq.s32.totalorder %s23, 1
      %p83 = por %p81, %p82
      %p84 = scmp.ne.s32.totalorder %s75, %s76
      %p85 = scmp.eq.s32.totalorder %s23, 0
      %p86 = por %p84, %p85
      %p87 = scmp.ne.s32.totalorder %s75, %s76
      %p88 = scmp.eq.s32.totalorder %s24, 1
      %p89 = por %p87, %p88
      %p91 = scmp.ne.s32.totalorder %s76, %s90
      %p92 = scmp.eq.s32.totalorder %s24, 0
      %p93 = por %p91, %p92
      %s95 = sadd.s32 %s94, 1
      %p98 = scmp.eq.s32.totalorder %s18, 1
      %p99 = scmp.ne.s32.totalorder %s94, %s96
      %p100 = scmp.eq.s32.totalorder %s18, 0
      %p101 = por %p99, %p100
      %p102 = scmp.ne.s32.totalorder %s94, %s96
      %p103 = scmp.eq.s32.totalorder %s23, 1
      %p104 = por %p102, %p103
      %p105 = scmp.ne.s32.totalorder %s96, %s97
      %p106 = scmp.eq.s32.totalorder %s23, 0
      %p107 = por %p105, %p106
      %p108 = scmp.ne.s32.totalorder %s96, %s97
      %p109 = scmp.eq.s32.totalorder %s24, 1
      %p110 = por %p108, %p109
      %p112 = scmp.ne.s32.totalorder %s97, %s111
      %p113 = scmp.eq.s32.totalorder %s24, 0
      %p114 = por %p112, %p113
      %s116 = sadd.s32 %s115, 1
      %p119 = scmp.eq.s32.totalorder %s18, 1
      %p120 = scmp.ne.s32.totalorder %s115, %s117
      %p121 = scmp.eq.s32.totalorder %s18, 0
      %p122 = por %p120, %p121
      %p123 = scmp.ne.s32.totalorder %s115, %s117
      %p124 = scmp.eq.s32.totalorder %s23, 1
      %p125 = por %p123, %p124
      %p126 = scmp.ne.s32.totalorder %s117, %s118
      %p127 = scmp.eq.s32.totalorder %s23, 0
      %p128 = por %p126, %p127
      %p129 = scmp.ne.s32.totalorder %s117, %s118
      %p130 = scmp.eq.s32.totalorder %s24, 1
      %p131 = por %p129, %p130
      %p133 = scmp.ne.s32.totalorder %s118, %s132
      %p134 = scmp.eq.s32.totalorder %s24, 0
      %p135 = por %p133, %p134
      %s136 = ssub.s32 %s18, %s25
      %p137 = scmp.eq.s32.totalorder %s136, 0
      %s139 = sadd.s32 %s138, 1
      %s140 = scalar_select %p137, %s138, %s139
      %p143 = pneg %p137
      %p144 = scmp.eq.s32.totalorder %s18, 1
      %p145 = por %p143, %p144
      %p146 = scmp.ne.s32.totalorder %s138, %s141
      %p147 = scmp.eq.s32.totalorder %s18, 0
      %p148 = por %p146, %p147
      %p149 = scmp.ne.s32.totalorder %s138, %s141
      %p150 = scmp.eq.s32.totalorder %s23, 1
      %p151 = por %p149, %p150
      %p152 = scmp.ne.s32.totalorder %s141, %s142
      %p153 = scmp.eq.s32.totalorder %s23, 0
      %p154 = por %p152, %p153
      %p155 = scmp.ne.s32.totalorder %s141, %s142
      %p156 = scmp.eq.s32.totalorder %s24, 1
      %p157 = por %p155, %p156
      %p159 = scmp.ne.s32.totalorder %s142, %s158
      %p160 = scmp.eq.s32.totalorder %s24, 0
      %p161 = por %p159, %p160
      %p162 = scmp.le.s32.totalorder 1, %s18
      %p163 = scmp.lt.s32.totalorder %s18, 3
      %p164 = pnand %p162, %p163
      %p165 = pneg %p164
      // Predicated region
      $region9: #{_residual_block.1} parent=5 // pred_check
        _
      $region10: #{_residual_block.1} parent=5 // pred_check_branch
        %167 = sbr.rel (%p164) target = $region12
      $region11: #{_residual_block.1} parent=5 // pred_region
        %s168 = ssub.s32 %s18, 1
        // Predicated region
        $region13: #{_residual_block.1} parent=11 // pred_check
          %p169 = pneg %p65
        $region14: #{_residual_block.1} parent=11 // pred_check_branch
          %171 = sbr.rel (%p169) target = $region16
        $region15: #{_residual_block.1} parent=11 // pred_region
          %s173 = ssub.s32 4096, 4096
          %174 = vsyncadd [#allocation6], %s173
          %s175 = sshll.u32 [#allocation5], 4
          %s176 = int_to_ptr.vmem [resolvable:$true] %s175
          %181 = dma.hbm_to_vmem [thread:$0]  %s1, 4096, %s176, [#allocation6], 128, 128, 8
        $region16: #{_residual_block.1} parent=11 // pred_fallthru
          _
        // Predicated region
        $region17: #{_residual_block.1} parent=11 // pred_check
          %p182 = pneg %p86
        $region18: #{_residual_block.1} parent=11 // pred_check_branch
          %184 = sbr.rel (%p182) target = $region20
        $region19: #{_residual_block.1} parent=11 // pred_region
          _
        $region20: #{_residual_block.1} parent=11 // pred_fallthru
          _
        // Predicated region
        $region21: #{_residual_block.1} parent=11 // pred_check
          %p185 = pneg %p107
        $region22: #{_residual_block.1} parent=11 // pred_check_branch
          %187 = sbr.rel (%p185) target = $region24
        $region23: #{_residual_block.1} parent=11 // pred_region
          %s189 = ssub.s32 4096, 4096
          %190 = vsyncadd [#allocation6], %s189
          %s191 = sshll.u32 [#allocation7], 4
          %s192 = int_to_ptr.vmem [resolvable:$true] %s191
          %197 = dma.hbm_to_vmem [thread:$0]  %s3, 4096, %s192, [#allocation6], 128, 128, 8
        $region24: #{_residual_block.1} parent=11 // pred_fallthru
          _
        // Predicated region
        $region25: #{_residual_block.1} parent=11 // pred_check
          %p198 = pneg %p128
        $region26: #{_residual_block.1} parent=11 // pred_check_branch
          %200 = sbr.rel (%p198) target = $region28
        $region27: #{_residual_block.1} parent=11 // pred_region
          _
        $region28: #{_residual_block.1} parent=11 // pred_fallthru
          _
      $region12: #{_residual_block.1} parent=5 // pred_fallthru
        _
      %p201 = scmp.lt.s32.totalorder %s18, 2
      // Predicated region
      $region29: #{_residual_block.1} parent=5 // pred_check
        %p202 = pneg %p201
      $region30: #{_residual_block.1} parent=5 // pred_check_branch
        %204 = sbr.rel (%p202) target = $region32
      $region31: #{_residual_block.1} parent=5 // pred_region
        // Predicated region
        $region33: #{_residual_block.1} parent=31 // pred_check
          %p205 = pneg %p38
        $region34: #{_residual_block.1} parent=31 // pred_check_branch
          %207 = sbr.rel (%p205) target = $region36
        $region35: #{_residual_block.1} parent=31 // pred_region
          %s208 = sand.u32 %s28, 1
          %s209 = scalar_lea.sflag [#allocation3], %s208
          %s210 = sand.u32 %s28, 1
          %s211 = smul.addr %s210, 512
          %s212 = scalar_lea.vmem [#allocation2], %s211
          %s213 = smul.u32 32, %s18
          %s215 = ssub.s32 8192, 8192
          %216 = vsyncadd %s209, %s215
          %s217 = smul.addr %s213, 2
          %s218 = smul.addr %s217, 128
          %s219 = scalar_lea.hbm %s0, %s218
          %s220 = sshll.u32 %s212, 4
          %s221 = int_to_ptr.vmem [resolvable:$true] %s220
          %226 = dma.hbm_to_vmem [thread:$0]  %s219, 8192, %s221, %s209, 256, 256, 16
        $region36: #{_residual_block.1} parent=31 // pred_fallthru
          _
      $region32: #{_residual_block.1} parent=5 // pred_fallthru
        _
      %p227 = scmp.le.s32.totalorder 1, %s18
      %p228 = scmp.lt.s32.totalorder %s18, 3
      %p229 = pnand %p227, %p228
      %p230 = pneg %p229
      // Predicated region
      $region37: #{_residual_block.1} parent=5 // pred_check
        _
      $region38: #{_residual_block.1} parent=5 // pred_check_branch
        %232 = sbr.rel (%p229) target = $region40
      $region39: #{_residual_block.1} parent=5 // pred_region
        %s233 = ssub.s32 %s18, 1
        %s234 = sand.u32 %s31, 1
        %s235 = scalar_lea.sflag [#allocation3], %s234
        %s236 = sand.u32 %s31, 1
        %s237 = smul.addr %s236, 512
        %s238 = scalar_lea.vmem [#allocation2], %s237
        // Predicated region
        $region41: #{_residual_block.1} parent=39 // pred_check
          %p239 = pneg %p44
        $region42: #{_residual_block.1} parent=39 // pred_check_branch
          %241 = sbr.rel (%p239) target = $region44
        $region43: #{_residual_block.1} parent=39 // pred_region
          %242 = dma.done %s235, 8192
        $region44: #{_residual_block.1} parent=39 // pred_fallthru
          _
        // Predicated region
        $region45: #{_residual_block.1} parent=39 // pred_check
          %p243 = pneg %p65
        $region46: #{_residual_block.1} parent=39 // pred_check_branch
          %245 = sbr.rel (%p243) target = $region48
        $region47: #{_residual_block.1} parent=39 // pred_region
          %246 = dma.done [#allocation6], 4096
        $region48: #{_residual_block.1} parent=39 // pred_fallthru
          _
        // Predicated region
        $region49: #{_residual_block.1} parent=39 // pred_check
          %p247 = pneg %p107
        $region50: #{_residual_block.1} parent=39 // pred_check_branch
          %249 = sbr.rel (%p247) target = $region52
        $region51: #{_residual_block.1} parent=39 // pred_region
          %250 = dma.done [#allocation6], 4096
        $region52: #{_residual_block.1} parent=39 // pred_fallthru
          _
        %s251 = sand.u32 %s31, 1
        %s252 = scalar_lea.sflag [#allocation3], %s251
        %s253 = sand.u32 %s31, 1
        %s254 = smul.addr %s253, 512
        %s255 = scalar_lea.vmem [#allocation2], %s254
        %p256 = pneg %p44
        %p257 = pneg %p41
        %p258 = pneg %p65
        %p259 = pneg %p62
        %p260 = pneg %p86
        %p261 = pneg %p83
        %p262 = pneg %p107
        %p263 = pneg %p104
        %p264 = pneg %p128
        %p265 = pneg %p125
        %p266 = pneg %p154
        %p267 = pneg %p151
        %s268 = sand.u32 %s141, 1
        %s269 = scalar_lea.sflag [#allocation4], %s268
        %s270 = sand.u32 %s141, 1
        %s271 = smul.addr %s270, 512
        %s272 = scalar_lea.vmem [#allocation8], %s271
        %s273 = smul.u32 32, %s23
        %s274 = smul.u32 32, %s23
        %v275 = vld [vmem:[%s238] sm:$0xff]
        %v276 = vld [vmem:[%s238 + $0x8] sm:$0xff]
        %v277 = vld [vmem:[%s238 + $0x10] sm:$0xff]
        %v278 = vld [vmem:[%s238 + $0x18] sm:$0xff]
        %v279 = vld [vmem:[%s238 + $0x20] sm:$0xff]
        %v280 = vld [vmem:[%s238 + $0x28] sm:$0xff]
        %v281 = vld [vmem:[%s238 + $0x30] sm:$0xff]
        %v282 = vld [vmem:[%s238 + $0x38] sm:$0xff]
        %v283 = vld [vmem:[%s238 + $0x40] sm:$0xff]
        %v284 = vld [vmem:[%s238 + $0x48] sm:$0xff]
        %v285 = vld [vmem:[%s238 + $0x50] sm:$0xff]
        %v286 = vld [vmem:[%s238 + $0x58] sm:$0xff]
        %v287 = vld [vmem:[%s238 + $0x60] sm:$0xff]
        %v288 = vld [vmem:[%s238 + $0x68] sm:$0xff]
        %v289 = vld [vmem:[%s238 + $0x70] sm:$0xff]
        %v290 = vld [vmem:[%s238 + $0x78] sm:$0xff]
        %v291 = vld [vmem:[%s238 + $0x80] sm:$0xff]
        %v292 = vld [vmem:[%s238 + $0x88] sm:$0xff]
        %v293 = vld [vmem:[%s238 + $0x90] sm:$0xff]
        %v294 = vld [vmem:[%s238 + $0x98] sm:$0xff]
        %v295 = vld [vmem:[%s238 + $0xa0] sm:$0xff]
        %v296 = vld [vmem:[%s238 + $0xa8] sm:$0xff]
        %v297 = vld [vmem:[%s238 + $0xb0] sm:$0xff]
        %v298 = vld [vmem:[%s238 + $0xb8] sm:$0xff]
        %v299 = vld [vmem:[%s238 + $0xc0] sm:$0xff]
        %v300 = vld [vmem:[%s238 + $0xc8] sm:$0xff]
        %v301 = vld [vmem:[%s238 + $0xd0] sm:$0xff]
        %v302 = vld [vmem:[%s238 + $0xd8] sm:$0xff]
        %v303 = vld [vmem:[%s238 + $0xe0] sm:$0xff]
        %v304 = vld [vmem:[%s238 + $0xe8] sm:$0xff]
        %v305 = vld [vmem:[%s238 + $0xf0] sm:$0xff]
        %v306 = vld [vmem:[%s238 + $0xf8] sm:$0xff]
        %v307 = vld [vmem:[%s238 + $0x100] sm:$0xff]
        %v308 = vld [vmem:[%s238 + $0x108] sm:$0xff]
        %v309 = vld [vmem:[%s238 + $0x110] sm:$0xff]
        %v310 = vld [vmem:[%s238 + $0x118] sm:$0xff]
        %v311 = vld [vmem:[%s238 + $0x120] sm:$0xff]
        %v312 = vld [vmem:[%s238 + $0x128] sm:$0xff]
        %v313 = vld [vmem:[%s238 + $0x130] sm:$0xff]
        %v314 = vld [vmem:[%s238 + $0x138] sm:$0xff]
        %v315 = vld [vmem:[%s238 + $0x140] sm:$0xff]
        %v316 = vld [vmem:[%s238 + $0x148] sm:$0xff]
        %v317 = vld [vmem:[%s238 + $0x150] sm:$0xff]
        %v318 = vld [vmem:[%s238 + $0x158] sm:$0xff]
        %v319 = vld [vmem:[%s238 + $0x160] sm:$0xff]
        %v320 = vld [vmem:[%s238 + $0x168] sm:$0xff]
        %v321 = vld [vmem:[%s238 + $0x170] sm:$0xff]
        %v322 = vld [vmem:[%s238 + $0x178] sm:$0xff]
        %v323 = vld [vmem:[%s238 + $0x180] sm:$0xff]
        %v324 = vld [vmem:[%s238 + $0x188] sm:$0xff]
        %v325 = vld [vmem:[%s238 + $0x190] sm:$0xff]
        %v326 = vld [vmem:[%s238 + $0x198] sm:$0xff]
        %v327 = vld [vmem:[%s238 + $0x1a0] sm:$0xff]
        %v328 = vld [vmem:[%s238 + $0x1a8] sm:$0xff]
        %v329 = vld [vmem:[%s238 + $0x1b0] sm:$0xff]
        %v330 = vld [vmem:[%s238 + $0x1b8] sm:$0xff]
        %v331 = vld [vmem:[%s238 + $0x1c0] sm:$0xff]
        %v332 = vld [vmem:[%s238 + $0x1c8] sm:$0xff]
        %v333 = vld [vmem:[%s238 + $0x1d0] sm:$0xff]
        %v334 = vld [vmem:[%s238 + $0x1d8] sm:$0xff]
        %v335 = vld [vmem:[%s238 + $0x1e0] sm:$0xff]
        %v336 = vld [vmem:[%s238 + $0x1e8] sm:$0xff]
        %v337 = vld [vmem:[%s238 + $0x1f0] sm:$0xff]
        %v338 = vld [vmem:[%s238 + $0x1f8] sm:$0xff]
        %v339 = vpack.c.bf16 %v277, %v275
        %v340 = vpack.c.bf16 %v278, %v276
        %v341 = vpack.c.bf16 %v281, %v279
        %v342 = vpack.c.bf16 %v282, %v280
        %v343 = vpack.c.bf16 %v285, %v283
        %v344 = vpack.c.bf16 %v286, %v284
        %v345 = vpack.c.bf16 %v289, %v287
        %v346 = vpack.c.bf16 %v290, %v288
        %v347 = vpack.c.bf16 %v293, %v291
        %v348 = vpack.c.bf16 %v294, %v292
        %v349 = vpack.c.bf16 %v297, %v295
        %v350 = vpack.c.bf16 %v298, %v296
        %v351 = vpack.c.bf16 %v301, %v299
        %v352 = vpack.c.bf16 %v302, %v300
        %v353 = vpack.c.bf16 %v305, %v303
        %v354 = vpack.c.bf16 %v306, %v304
        %v355 = vpack.c.bf16 %v309, %v307
        %v356 = vpack.c.bf16 %v310, %v308
        %v357 = vpack.c.bf16 %v313, %v311
        %v358 = vpack.c.bf16 %v314, %v312
        %v359 = vpack.c.bf16 %v317, %v315
        %v360 = vpack.c.bf16 %v318, %v316
        %v361 = vpack.c.bf16 %v321, %v319
        %v362 = vpack.c.bf16 %v322, %v320
        %v363 = vpack.c.bf16 %v325, %v323
        %v364 = vpack.c.bf16 %v326, %v324
        %v365 = vpack.c.bf16 %v329, %v327
        %v366 = vpack.c.bf16 %v330, %v328
        %v367 = vpack.c.bf16 %v333, %v331
        %v368 = vpack.c.bf16 %v334, %v332
        %v369 = vpack.c.bf16 %v337, %v335
        %v370 = vpack.c.bf16 %v338, %v336
        %v371 = vld [vmem:[#allocation5] sm:$0xff]
        %v372 = vld [vmem:[#allocation5 + $0x8] sm:$0xff]
        %v373 = vld [vmem:[#allocation5 + $0x10] sm:$0xff]
        %v374 = vld [vmem:[#allocation5 + $0x18] sm:$0xff]
        %v375 = vld [vmem:[#allocation5 + $0x20] sm:$0xff]
        %v376 = vld [vmem:[#allocation5 + $0x28] sm:$0xff]
        %v377 = vld [vmem:[#allocation5 + $0x30] sm:$0xff]
        %v378 = vld [vmem:[#allocation5 + $0x38] sm:$0xff]
        %v379 = vld [vmem:[#allocation5 + $0x40] sm:$0xff]
        %v380 = vld [vmem:[#allocation5 + $0x48] sm:$0xff]
        %v381 = vld [vmem:[#allocation5 + $0x50] sm:$0xff]
        %v382 = vld [vmem:[#allocation5 + $0x58] sm:$0xff]
        %v383 = vld [vmem:[#allocation5 + $0x60] sm:$0xff]
        %v384 = vld [vmem:[#allocation5 + $0x68] sm:$0xff]
        %v385 = vld [vmem:[#allocation5 + $0x70] sm:$0xff]
        %v386 = vld [vmem:[#allocation5 + $0x78] sm:$0xff]
        %v387 = vld [vmem:[#allocation5 + $0x80] sm:$0xff]
        %v388 = vld [vmem:[#allocation5 + $0x88] sm:$0xff]
        %v389 = vld [vmem:[#allocation5 + $0x90] sm:$0xff]
        %v390 = vld [vmem:[#allocation5 + $0x98] sm:$0xff]
        %v391 = vld [vmem:[#allocation5 + $0xa0] sm:$0xff]
        %v392 = vld [vmem:[#allocation5 + $0xa8] sm:$0xff]
        %v393 = vld [vmem:[#allocation5 + $0xb0] sm:$0xff]
        %v394 = vld [vmem:[#allocation5 + $0xb8] sm:$0xff]
        %v395 = vld [vmem:[#allocation5 + $0xc0] sm:$0xff]
        %v396 = vld [vmem:[#allocation5 + $0xc8] sm:$0xff]
        %v397 = vld [vmem:[#allocation5 + $0xd0] sm:$0xff]
        %v398 = vld [vmem:[#allocation5 + $0xd8] sm:$0xff]
        %v399 = vld [vmem:[#allocation5 + $0xe0] sm:$0xff]
        %v400 = vld [vmem:[#allocation5 + $0xe8] sm:$0xff]
        %v401 = vld [vmem:[#allocation5 + $0xf0] sm:$0xff]
        %v402 = vld [vmem:[#allocation5 + $0xf8] sm:$0xff]
        %v403 = vld [vmem:[%s2] sm:$0x3]
        %v405 = vlaneseq
        %v406 = vshrl.u32 %v405, 7
        %v407 = vsub.s32 0, %v406
        %v408 = vrot.slane %v403, %v407
        %v409 = vlaneseq
        %v410 = vshrl.u32 %v409, 7
        %v411 = vsub.s32 1, %v410
        %v412 = vrot.slane %v403, %v411
        %v447 = vunpack.c.l.b16 %v371
        %v448 = vunpack.c.h.b16 %v371
        %v449 = vunpack.c.l.b16 %v372
        %v450 = vunpack.c.h.b16 %v372
        %v451 = vunpack.c.l.b16 %v373
        %v452 = vunpack.c.h.b16 %v373
        %v453 = vunpack.c.l.b16 %v374
        %v454 = vunpack.c.h.b16 %v374
        %v455 = vunpack.c.l.b16 %v375
        %v456 = vunpack.c.h.b16 %v375
        %v457 = vunpack.c.l.b16 %v376
        %v458 = vunpack.c.h.b16 %v376
        %v459 = vunpack.c.l.b16 %v377
        %v460 = vunpack.c.h.b16 %v377
        %v461 = vunpack.c.l.b16 %v378
        %v462 = vunpack.c.h.b16 %v378
        %v463 = vunpack.c.l.b16 %v379
        %v464 = vunpack.c.h.b16 %v379
        %v465 = vunpack.c.l.b16 %v380
        %v466 = vunpack.c.h.b16 %v380
        %v467 = vunpack.c.l.b16 %v381
        %v468 = vunpack.c.h.b16 %v381
        %v469 = vunpack.c.l.b16 %v382
        %v470 = vunpack.c.h.b16 %v382
        %v471 = vunpack.c.l.b16 %v383
        %v472 = vunpack.c.h.b16 %v383
        %v473 = vunpack.c.l.b16 %v384
        %v474 = vunpack.c.h.b16 %v384
        %v475 = vunpack.c.l.b16 %v385
        %v476 = vunpack.c.h.b16 %v385
        %v477 = vunpack.c.l.b16 %v386
        %v478 = vunpack.c.h.b16 %v386
        %v479 = vunpack.c.l.b16 %v387
        %v480 = vunpack.c.h.b16 %v387
        %v481 = vunpack.c.l.b16 %v388
        %v482 = vunpack.c.h.b16 %v388
        %v483 = vunpack.c.l.b16 %v389
        %v484 = vunpack.c.h.b16 %v389
        %v485 = vunpack.c.l.b16 %v390
        %v486 = vunpack.c.h.b16 %v390
        %v487 = vunpack.c.l.b16 %v391
        %v488 = vunpack.c.h.b16 %v391
        %v489 = vunpack.c.l.b16 %v392
        %v490 = vunpack.c.h.b16 %v392
        %v491 = vunpack.c.l.b16 %v393
        %v492 = vunpack.c.h.b16 %v393
        %v493 = vunpack.c.l.b16 %v394
        %v494 = vunpack.c.h.b16 %v394
        %v495 = vunpack.c.l.b16 %v395
        %v496 = vunpack.c.h.b16 %v395
        %v497 = vunpack.c.l.b16 %v396
        %v498 = vunpack.c.h.b16 %v396
        %v499 = vunpack.c.l.b16 %v397
        %v500 = vunpack.c.h.b16 %v397
        %v501 = vunpack.c.l.b16 %v398
        %v502 = vunpack.c.h.b16 %v398
        %v503 = vunpack.c.l.b16 %v399
        %v504 = vunpack.c.h.b16 %v399
        %v505 = vunpack.c.l.b16 %v400
        %v506 = vunpack.c.h.b16 %v400
        %v507 = vunpack.c.l.b16 %v401
        %v508 = vunpack.c.h.b16 %v401
        %v509 = vunpack.c.l.b16 %v402
        %v510 = vunpack.c.h.b16 %v402
        %v511 = vpack.c.b16 %v449, %v447
        %v512 = vpack.c.b16 %v450, %v448
        %v513 = vpack.c.b16 %v453, %v451
        %v514 = vpack.c.b16 %v454, %v452
        %v515 = vpack.c.b16 %v457, %v455
        %v516 = vpack.c.b16 %v458, %v456
        %v517 = vpack.c.b16 %v461, %v459
        %v518 = vpack.c.b16 %v462, %v460
        %v519 = vpack.c.b16 %v465, %v463
        %v520 = vpack.c.b16 %v466, %v464
        %v521 = vpack.c.b16 %v469, %v467
        %v522 = vpack.c.b16 %v470, %v468
        %v523 = vpack.c.b16 %v473, %v471
        %v524 = vpack.c.b16 %v474, %v472
        %v525 = vpack.c.b16 %v477, %v475
        %v526 = vpack.c.b16 %v478, %v476
        %v527 = vpack.c.b16 %v481, %v479
        %v528 = vpack.c.b16 %v482, %v480
        %v529 = vpack.c.b16 %v485, %v483
        %v530 = vpack.c.b16 %v486, %v484
        %v531 = vpack.c.b16 %v489, %v487
        %v532 = vpack.c.b16 %v490, %v488
        %v533 = vpack.c.b16 %v493, %v491
        %v534 = vpack.c.b16 %v494, %v492
        %v535 = vpack.c.b16 %v497, %v495
        %v536 = vpack.c.b16 %v498, %v496
        %v537 = vpack.c.b16 %v501, %v499
        %v538 = vpack.c.b16 %v502, %v500
        %v539 = vpack.c.b16 %v505, %v503
        %v540 = vpack.c.b16 %v506, %v504
        %v541 = vpack.c.b16 %v509, %v507
        %v542 = vpack.c.b16 %v510, %v508
        %575 = vmatprep.subr.bf16.mxu0 %v512
        %576 = vmatpush1.bf16.msra.mxu0 %v511
        %577 = vmatprep.subr.bf16.mxu0 %v514
        %578 = vmatpush1.bf16.msra.mxu0 %v513
        %579 = vmatprep.subr.bf16.mxu0 %v516
        %580 = vmatpush1.bf16.msra.mxu0 %v515
        %581 = vmatprep.subr.bf16.mxu0 %v518
        %582 = vmatpush1.bf16.msra.mxu0 %v517
        %583 = vmatprep.subr.bf16.mxu0 %v520
        %584 = vmatpush1.bf16.msra.mxu0 %v519
        %585 = vmatprep.subr.bf16.mxu0 %v522
        %586 = vmatpush1.bf16.msra.mxu0 %v521
        %587 = vmatprep.subr.bf16.mxu0 %v524
        %588 = vmatpush1.bf16.msra.mxu0 %v523
        %589 = vmatprep.subr.bf16.mxu0 %v526
        %590 = vmatpush1.bf16.msra.mxu0 %v525
        %591 = vmatprep.subr.bf16.mxu0 %v528
        %592 = vmatpush1.bf16.msra.mxu0 %v527
        %593 = vmatprep.subr.bf16.mxu0 %v530
        %594 = vmatpush1.bf16.msra.mxu0 %v529
        %595 = vmatprep.subr.bf16.mxu0 %v532
        %596 = vmatpush1.bf16.msra.mxu0 %v531
        %597 = vmatprep.subr.bf16.mxu0 %v534
        %598 = vmatpush1.bf16.msra.mxu0 %v533
        %599 = vmatprep.subr.bf16.mxu0 %v536
        %600 = vmatpush1.bf16.msra.mxu0 %v535
        %601 = vmatprep.subr.bf16.mxu0 %v538
        %602 = vmatpush1.bf16.msra.mxu0 %v537
        %603 = vmatprep.subr.bf16.mxu0 %v540
        %604 = vmatpush1.bf16.msra.mxu0 %v539
        %605 = vmatprep.subr.bf16.mxu0 %v542
        %606 = vmatpush1.bf16.msra.mxu0 %v541
        %607 = vmatprep.mubr.bf16.mxu0 %v340
        %608 = vmatmul.mubr.bf16.gmra.mrb[0].mxu0 %v339
        %v609 = vpop.f32.mrb[0].mxu0
        %v610 = vadd.f32 %v408, %v609
        %v611 = vpop.f32.mrb[0].mxu0
        %v612 = vadd.f32 %v412, %v611
        %v613 = vpop.f32.mrb[0].mxu0
        %v614 = vadd.f32 %v408, %v613
        %v615 = vpop.f32.mrb[0].mxu0
        %v616 = vadd.f32 %v412, %v615
        %617 = vmatprep.mubr.bf16.mxu0 %v342
        %618 = vmatmul.mubr.bf16.gmra.mrb[0].mxu0 %v341
        %v619 = vpop.f32.mrb[0].mxu0
        %v620 = vadd.f32 %v408, %v619
        %v621 = vpop.f32.mrb[0].mxu0
        %v622 = vadd.f32 %v412, %v621
        %v623 = vpop.f32.mrb[0].mxu0
        %v624 = vadd.f32 %v408, %v623
        %v625 = vpop.f32.mrb[0].mxu0
        %v626 = vadd.f32 %v412, %v625
        %627 = vmatprep.mubr.bf16.mxu0 %v344
        %628 = vmatmul.mubr.bf16.gmra.mrb[0].mxu0 %v343
        %v629 = vpop.f32.mrb[0].mxu0
        %v630 = vadd.f32 %v408, %v629
        %v631 = vpop.f32.mrb[0].mxu0
        %v632 = vadd.f32 %v412, %v631
        %v633 = vpop.f32.mrb[0].mxu0
        %v634 = vadd.f32 %v408, %v633
        %v635 = vpop.f32.mrb[0].mxu0
        %v636 = vadd.f32 %v412, %v635
        %637 = vmatprep.mubr.bf16.mxu0 %v346
        %638 = vmatmul.mubr.bf16.gmra.mrb[0].mxu0 %v345
        %v639 = vpop.f32.mrb[0].mxu0
        %v640 = vadd.f32 %v408, %v639
        %v641 = vpop.f32.mrb[0].mxu0
        %v642 = vadd.f32 %v412, %v641
        %v643 = vpop.f32.mrb[0].mxu0
        %v644 = vadd.f32 %v408, %v643
        %v645 = vpop.f32.mrb[0].mxu0
        %v646 = vadd.f32 %v412, %v645
        %647 = vmatprep.mubr.bf16.mxu0 %v348
        %648 = vmatmul.mubr.bf16.gmra.mrb[0].mxu0 %v347
        %v649 = vpop.f32.mrb[0].mxu0
        %v650 = vadd.f32 %v408, %v649
        %v651 = vpop.f32.mrb[0].mxu0
        %v652 = vadd.f32 %v412, %v651
        %v653 = vpop.f32.mrb[0].mxu0
        %v654 = vadd.f32 %v408, %v653
        %v655 = vpop.f32.mrb[0].mxu0
        %v656 = vadd.f32 %v412, %v655
        %657 = vmatprep.mubr.bf16.mxu0 %v350
        %658 = vmatmul.mubr.bf16.gmra.mrb[0].mxu0 %v349
        %v659 = vpop.f32.mrb[0].mxu0
        %v660 = vadd.f32 %v408, %v659
        %v661 = vpop.f32.mrb[0].mxu0
        %v662 = vadd.f32 %v412, %v661
        %v663 = vpop.f32.mrb[0].mxu0
        %v664 = vadd.f32 %v408, %v663
        %v665 = vpop.f32.mrb[0].mxu0
        %v666 = vadd.f32 %v412, %v665
        %667 = vmatprep.mubr.bf16.mxu0 %v352
        %668 = vmatmul.mubr.bf16.gmra.mrb[0].mxu0 %v351
        %v669 = vpop.f32.mrb[0].mxu0
        %v670 = vadd.f32 %v408, %v669
        %v671 = vpop.f32.mrb[0].mxu0
        %v672 = vadd.f32 %v412, %v671
        %v673 = vpop.f32.mrb[0].mxu0
        %v674 = vadd.f32 %v408, %v673
        %v675 = vpop.f32.mrb[0].mxu0
        %v676 = vadd.f32 %v412, %v675
        %677 = vmatprep.mubr.bf16.mxu0 %v354
        %678 = vmatmul.mubr.bf16.gmra.mrb[0].mxu0 %v353
        %v679 = vpop.f32.mrb[0].mxu0
        %v680 = vadd.f32 %v408, %v679
        %v681 = vpop.f32.mrb[0].mxu0
        %v682 = vadd.f32 %v412, %v681
        %v683 = vpop.f32.mrb[0].mxu0
        %v684 = vadd.f32 %v408, %v683
        %v685 = vpop.f32.mrb[0].mxu0
        %v686 = vadd.f32 %v412, %v685
        %687 = vmatprep.mubr.bf16.mxu0 %v356
        %688 = vmatmul.mubr.bf16.gmra.mrb[0].mxu0 %v355
        %v689 = vpop.f32.mrb[0].mxu0
        %v690 = vadd.f32 %v408, %v689
        %v691 = vpop.f32.mrb[0].mxu0
        %v692 = vadd.f32 %v412, %v691
        %v693 = vpop.f32.mrb[0].mxu0
        %v694 = vadd.f32 %v408, %v693
        %v695 = vpop.f32.mrb[0].mxu0
        %v696 = vadd.f32 %v412, %v695
        %697 = vmatprep.mubr.bf16.mxu0 %v358
        %698 = vmatmul.mubr.bf16.gmra.mrb[0].mxu0 %v357
        %v699 = vpop.f32.mrb[0].mxu0
        %v700 = vadd.f32 %v408, %v699
        %v701 = vpop.f32.mrb[0].mxu0
        %v702 = vadd.f32 %v412, %v701
        %v703 = vpop.f32.mrb[0].mxu0
        %v704 = vadd.f32 %v408, %v703
        %v705 = vpop.f32.mrb[0].mxu0
        %v706 = vadd.f32 %v412, %v705
        %707 = vmatprep.mubr.bf16.mxu0 %v360
        %708 = vmatmul.mubr.bf16.gmra.mrb[0].mxu0 %v359
        %v709 = vpop.f32.mrb[0].mxu0
        %v710 = vadd.f32 %v408, %v709
        %v711 = vpop.f32.mrb[0].mxu0
        %v712 = vadd.f32 %v412, %v711
        %v713 = vpop.f32.mrb[0].mxu0
        %v714 = vadd.f32 %v408, %v713
        %v715 = vpop.f32.mrb[0].mxu0
        %v716 = vadd.f32 %v412, %v715
        %717 = vmatprep.mubr.bf16.mxu0 %v362
        %718 = vmatmul.mubr.bf16.gmra.mrb[0].mxu0 %v361
        %v719 = vpop.f32.mrb[0].mxu0
        %v720 = vadd.f32 %v408, %v719
        %v721 = vpop.f32.mrb[0].mxu0
        %v722 = vadd.f32 %v412, %v721
        %v723 = vpop.f32.mrb[0].mxu0
        %v724 = vadd.f32 %v408, %v723
        %v725 = vpop.f32.mrb[0].mxu0
        %v726 = vadd.f32 %v412, %v725
        %727 = vmatprep.mubr.bf16.mxu0 %v364
        %728 = vmatmul.mubr.bf16.gmra.mrb[0].mxu0 %v363
        %v729 = vpop.f32.mrb[0].mxu0
        %v730 = vadd.f32 %v408, %v729
        %v731 = vpop.f32.mrb[0].mxu0
        %v732 = vadd.f32 %v412, %v731
        %v733 = vpop.f32.mrb[0].mxu0
        %v734 = vadd.f32 %v408, %v733
        %v735 = vpop.f32.mrb[0].mxu0
        %v736 = vadd.f32 %v412, %v735
        %737 = vmatprep.mubr.bf16.mxu0 %v366
        %738 = vmatmul.mubr.bf16.gmra.mrb[0].mxu0 %v365
        %v739 = vpop.f32.mrb[0].mxu0
        %v740 = vadd.f32 %v408, %v739
        %v741 = vpop.f32.mrb[0].mxu0
        %v742 = vadd.f32 %v412, %v741
        %v743 = vpop.f32.mrb[0].mxu0
        %v744 = vadd.f32 %v408, %v743
        %v745 = vpop.f32.mrb[0].mxu0
        %v746 = vadd.f32 %v412, %v745
        %747 = vmatprep.mubr.bf16.mxu0 %v368
        %748 = vmatmul.mubr.bf16.gmra.mrb[0].mxu0 %v367
        %v749 = vpop.f32.mrb[0].mxu0
        %v750 = vadd.f32 %v408, %v749
        %v751 = vpop.f32.mrb[0].mxu0
        %v752 = vadd.f32 %v412, %v751
        %v753 = vpop.f32.mrb[0].mxu0
        %v754 = vadd.f32 %v408, %v753
        %v755 = vpop.f32.mrb[0].mxu0
        %v756 = vadd.f32 %v412, %v755
        %757 = vmatprep.mubr.bf16.mxu0 %v370
        %758 = vmatmul.mubr.bf16.gmra.mrb[0].mxu0 %v369
        %v759 = vpop.f32.mrb[0].mxu0
        %v760 = vadd.f32 %v408, %v759
        %v761 = vpop.f32.mrb[0].mxu0
        %v762 = vadd.f32 %v412, %v761
        %v763 = vpop.f32.mrb[0].mxu0
        %v764 = vadd.f32 %v408, %v763
        %v765 = vpop.f32.mrb[0].mxu0
        %v766 = vadd.f32 %v412, %v765
        %767 = vdwg.mxu0
        %v768 = vmax.f32 %v610, 0.0
        %v769 = vmax.f32 %v612, 0.0
        %v770 = vmax.f32 %v614, 0.0
        %v771 = vmax.f32 %v616, 0.0
        %v772 = vmax.f32 %v620, 0.0
        %v773 = vmax.f32 %v622, 0.0
        %v774 = vmax.f32 %v624, 0.0
        %v775 = vmax.f32 %v626, 0.0
        %v776 = vmax.f32 %v630, 0.0
        %v777 = vmax.f32 %v632, 0.0
        %v778 = vmax.f32 %v634, 0.0
        %v779 = vmax.f32 %v636, 0.0
        %v780 = vmax.f32 %v640, 0.0
        %v781 = vmax.f32 %v642, 0.0
        %v782 = vmax.f32 %v644, 0.0
        %v783 = vmax.f32 %v646, 0.0
        %v784 = vmax.f32 %v650, 0.0
        %v785 = vmax.f32 %v652, 0.0
        %v786 = vmax.f32 %v654, 0.0
        %v787 = vmax.f32 %v656, 0.0
        %v788 = vmax.f32 %v660, 0.0
        %v789 = vmax.f32 %v662, 0.0
        %v790 = vmax.f32 %v664, 0.0
        %v791 = vmax.f32 %v666, 0.0
        %v792 = vmax.f32 %v670, 0.0
        %v793 = vmax.f32 %v672, 0.0
        %v794 = vmax.f32 %v674, 0.0
        %v795 = vmax.f32 %v676, 0.0
        %v796 = vmax.f32 %v680, 0.0
        %v797 = vmax.f32 %v682, 0.0
        %v798 = vmax.f32 %v684, 0.0
        %v799 = vmax.f32 %v686, 0.0
        %v800 = vmax.f32 %v690, 0.0
        %v801 = vmax.f32 %v692, 0.0
        %v802 = vmax.f32 %v694, 0.0
        %v803 = vmax.f32 %v696, 0.0
        %v804 = vmax.f32 %v700, 0.0
        %v805 = vmax.f32 %v702, 0.0
        %v806 = vmax.f32 %v704, 0.0
        %v807 = vmax.f32 %v706, 0.0
        %v808 = vmax.f32 %v710, 0.0
        %v809 = vmax.f32 %v712, 0.0
        %v810 = vmax.f32 %v714, 0.0
        %v811 = vmax.f32 %v716, 0.0
        %v812 = vmax.f32 %v720, 0.0
        %v813 = vmax.f32 %v722, 0.0
        %v814 = vmax.f32 %v724, 0.0
        %v815 = vmax.f32 %v726, 0.0
        %v816 = vmax.f32 %v730, 0.0
        %v817 = vmax.f32 %v732, 0.0
        %v818 = vmax.f32 %v734, 0.0
        %v819 = vmax.f32 %v736, 0.0
        %v820 = vmax.f32 %v740, 0.0
        %v821 = vmax.f32 %v742, 0.0
        %v822 = vmax.f32 %v744, 0.0
        %v823 = vmax.f32 %v746, 0.0
        %v824 = vmax.f32 %v750, 0.0
        %v825 = vmax.f32 %v752, 0.0
        %v826 = vmax.f32 %v754, 0.0
        %v827 = vmax.f32 %v756, 0.0
        %v828 = vmax.f32 %v760, 0.0
        %v829 = vmax.f32 %v762, 0.0
        %v830 = vmax.f32 %v764, 0.0
        %v831 = vmax.f32 %v766, 0.0
        %v832 = vpack.c.bf16 %v770, %v768
        %v833 = vpack.c.bf16 %v771, %v769
        %v834 = vpack.c.bf16 %v774, %v772
        %v835 = vpack.c.bf16 %v775, %v773
        %v836 = vpack.c.bf16 %v778, %v776
        %v837 = vpack.c.bf16 %v779, %v777
        %v838 = vpack.c.bf16 %v782, %v780
        %v839 = vpack.c.bf16 %v783, %v781
        %v840 = vpack.c.bf16 %v786, %v784
        %v841 = vpack.c.bf16 %v787, %v785
        %v842 = vpack.c.bf16 %v790, %v788
        %v843 = vpack.c.bf16 %v791, %v789
        %v844 = vpack.c.bf16 %v794, %v792
        %v845 = vpack.c.bf16 %v795, %v793
        %v846 = vpack.c.bf16 %v798, %v796
        %v847 = vpack.c.bf16 %v799, %v797
        %v848 = vpack.c.bf16 %v802, %v800
        %v849 = vpack.c.bf16 %v803, %v801
        %v850 = vpack.c.bf16 %v806, %v804
        %v851 = vpack.c.bf16 %v807, %v805
        %v852 = vpack.c.bf16 %v810, %v808
        %v853 = vpack.c.bf16 %v811, %v809
        %v854 = vpack.c.bf16 %v814, %v812
        %v855 = vpack.c.bf16 %v815, %v813
        %v856 = vpack.c.bf16 %v818, %v816
        %v857 = vpack.c.bf16 %v819, %v817
        %v858 = vpack.c.bf16 %v822, %v820
        %v859 = vpack.c.bf16 %v823, %v821
        %v860 = vpack.c.bf16 %v826, %v824
        %v861 = vpack.c.bf16 %v827, %v825
        %v862 = vpack.c.bf16 %v830, %v828
        %v863 = vpack.c.bf16 %v831, %v829
        %v864 = vld [vmem:[#allocation7] sm:$0xff]
        %v865 = vld [vmem:[#allocation7 + $0x8] sm:$0xff]
        %v866 = vld [vmem:[#allocation7 + $0x10] sm:$0xff]
        %v867 = vld [vmem:[#allocation7 + $0x18] sm:$0xff]
        %v868 = vld [vmem:[#allocation7 + $0x20] sm:$0xff]
        %v869 = vld [vmem:[#allocation7 + $0x28] sm:$0xff]
        %v870 = vld [vmem:[#allocation7 + $0x30] sm:$0xff]
        %v871 = vld [vmem:[#allocation7 + $0x38] sm:$0xff]
        %v872 = vld [vmem:[#allocation7 + $0x40] sm:$0xff]
        %v873 = vld [vmem:[#allocation7 + $0x48] sm:$0xff]
        %v874 = vld [vmem:[#allocation7 + $0x50] sm:$0xff]
        %v875 = vld [vmem:[#allocation7 + $0x58] sm:$0xff]
        %v876 = vld [vmem:[#allocation7 + $0x60] sm:$0xff]
        %v877 = vld [vmem:[#allocation7 + $0x68] sm:$0xff]
        %v878 = vld [vmem:[#allocation7 + $0x70] sm:$0xff]
        %v879 = vld [vmem:[#allocation7 + $0x78] sm:$0xff]
        %v880 = vld [vmem:[#allocation7 + $0x80] sm:$0xff]
        %v881 = vld [vmem:[#allocation7 + $0x88] sm:$0xff]
        %v882 = vld [vmem:[#allocation7 + $0x90] sm:$0xff]
        %v883 = vld [vmem:[#allocation7 + $0x98] sm:$0xff]
        %v884 = vld [vmem:[#allocation7 + $0xa0] sm:$0xff]
        %v885 = vld [vmem:[#allocation7 + $0xa8] sm:$0xff]
        %v886 = vld [vmem:[#allocation7 + $0xb0] sm:$0xff]
        %v887 = vld [vmem:[#allocation7 + $0xb8] sm:$0xff]
        %v888 = vld [vmem:[#allocation7 + $0xc0] sm:$0xff]
        %v889 = vld [vmem:[#allocation7 + $0xc8] sm:$0xff]
        %v890 = vld [vmem:[#allocation7 + $0xd0] sm:$0xff]
        %v891 = vld [vmem:[#allocation7 + $0xd8] sm:$0xff]
        %v892 = vld [vmem:[#allocation7 + $0xe0] sm:$0xff]
        %v893 = vld [vmem:[#allocation7 + $0xe8] sm:$0xff]
        %v894 = vld [vmem:[#allocation7 + $0xf0] sm:$0xff]
        %v895 = vld [vmem:[#allocation7 + $0xf8] sm:$0xff]
        %v896 = vld [vmem:[%s4] sm:$0x3]
        %v898 = vlaneseq
        %v899 = vshrl.u32 %v898, 7
        %v900 = vsub.s32 0, %v899
        %v901 = vrot.slane %v896, %v900
        %v902 = vlaneseq
        %v903 = vshrl.u32 %v902, 7
        %v904 = vsub.s32 1, %v903
        %v905 = vrot.slane %v896, %v904
        %v940 = vunpack.c.l.b16 %v864
        %v941 = vunpack.c.h.b16 %v864
        %v942 = vunpack.c.l.b16 %v865
        %v943 = vunpack.c.h.b16 %v865
        %v944 = vunpack.c.l.b16 %v866
        %v945 = vunpack.c.h.b16 %v866
        %v946 = vunpack.c.l.b16 %v867
        %v947 = vunpack.c.h.b16 %v867
        %v948 = vunpack.c.l.b16 %v868
        %v949 = vunpack.c.h.b16 %v868
        %v950 = vunpack.c.l.b16 %v869
        %v951 = vunpack.c.h.b16 %v869
        %v952 = vunpack.c.l.b16 %v870
        %v953 = vunpack.c.h.b16 %v870
        %v954 = vunpack.c.l.b16 %v871
        %v955 = vunpack.c.h.b16 %v871
        %v956 = vunpack.c.l.b16 %v872
        %v957 = vunpack.c.h.b16 %v872
        %v958 = vunpack.c.l.b16 %v873
        %v959 = vunpack.c.h.b16 %v873
        %v960 = vunpack.c.l.b16 %v874
        %v961 = vunpack.c.h.b16 %v874
        %v962 = vunpack.c.l.b16 %v875
        %v963 = vunpack.c.h.b16 %v875
        %v964 = vunpack.c.l.b16 %v876
        %v965 = vunpack.c.h.b16 %v876
        %v966 = vunpack.c.l.b16 %v877
        %v967 = vunpack.c.h.b16 %v877
        %v968 = vunpack.c.l.b16 %v878
        %v969 = vunpack.c.h.b16 %v878
        %v970 = vunpack.c.l.b16 %v879
        %v971 = vunpack.c.h.b16 %v879
        %v972 = vunpack.c.l.b16 %v880
        %v973 = vunpack.c.h.b16 %v880
        %v974 = vunpack.c.l.b16 %v881
        %v975 = vunpack.c.h.b16 %v881
        %v976 = vunpack.c.l.b16 %v882
        %v977 = vunpack.c.h.b16 %v882
        %v978 = vunpack.c.l.b16 %v883
        %v979 = vunpack.c.h.b16 %v883
        %v980 = vunpack.c.l.b16 %v884
        %v981 = vunpack.c.h.b16 %v884
        %v982 = vunpack.c.l.b16 %v885
        %v983 = vunpack.c.h.b16 %v885
        %v984 = vunpack.c.l.b16 %v886
        %v985 = vunpack.c.h.b16 %v886
        %v986 = vunpack.c.l.b16 %v887
        %v987 = vunpack.c.h.b16 %v887
        %v988 = vunpack.c.l.b16 %v888
        %v989 = vunpack.c.h.b16 %v888
        %v990 = vunpack.c.l.b16 %v889
        %v991 = vunpack.c.h.b16 %v889
        %v992 = vunpack.c.l.b16 %v890
        %v993 = vunpack.c.h.b16 %v890
        %v994 = vunpack.c.l.b16 %v891
        %v995 = vunpack.c.h.b16 %v891
        %v996 = vunpack.c.l.b16 %v892
        %v997 = vunpack.c.h.b16 %v892
        %v998 = vunpack.c.l.b16 %v893
        %v999 = vunpack.c.h.b16 %v893
        %v1000 = vunpack.c.l.b16 %v894
        %v1001 = vunpack.c.h.b16 %v894
        %v1002 = vunpack.c.l.b16 %v895
        %v1003 = vunpack.c.h.b16 %v895
        %v1004 = vpack.c.b16 %v942, %v940
        %v1005 = vpack.c.b16 %v943, %v941
        %v1006 = vpack.c.b16 %v946, %v944
        %v1007 = vpack.c.b16 %v947, %v945
        %v1008 = vpack.c.b16 %v950, %v948
        %v1009 = vpack.c.b16 %v951, %v949
        %v1010 = vpack.c.b16 %v954, %v952
        %v1011 = vpack.c.b16 %v955, %v953
        %v1012 = vpack.c.b16 %v958, %v956
        %v1013 = vpack.c.b16 %v959, %v957
        %v1014 = vpack.c.b16 %v962, %v960
        %v1015 = vpack.c.b16 %v963, %v961
        %v1016 = vpack.c.b16 %v966, %v964
        %v1017 = vpack.c.b16 %v967, %v965
        %v1018 = vpack.c.b16 %v970, %v968
        %v1019 = vpack.c.b16 %v971, %v969
        %v1020 = vpack.c.b16 %v974, %v972
        %v1021 = vpack.c.b16 %v975, %v973
        %v1022 = vpack.c.b16 %v978, %v976
        %v1023 = vpack.c.b16 %v979, %v977
        %v1024 = vpack.c.b16 %v982, %v980
        %v1025 = vpack.c.b16 %v983, %v981
        %v1026 = vpack.c.b16 %v986, %v984
        %v1027 = vpack.c.b16 %v987, %v985
        %v1028 = vpack.c.b16 %v990, %v988
        %v1029 = vpack.c.b16 %v991, %v989
        %v1030 = vpack.c.b16 %v994, %v992
        %v1031 = vpack.c.b16 %v995, %v993
        %v1032 = vpack.c.b16 %v998, %v996
        %v1033 = vpack.c.b16 %v999, %v997
        %v1034 = vpack.c.b16 %v1002, %v1000
        %v1035 = vpack.c.b16 %v1003, %v1001
        %1068 = vmatprep.subr.bf16.mxu0 %v1005
        %1069 = vmatpush1.bf16.msra.mxu0 %v1004
        %1070 = vmatprep.subr.bf16.mxu0 %v1007
        %1071 = vmatpush1.bf16.msra.mxu0 %v1006
        %1072 = vmatprep.subr.bf16.mxu0 %v1009
        %1073 = vmatpush1.bf16.msra.mxu0 %v1008
        %1074 = vmatprep.subr.bf16.mxu0 %v1011
        %1075 = vmatpush1.bf16.msra.mxu0 %v1010
        %1076 = vmatprep.subr.bf16.mxu0 %v1013
        %1077 = vmatpush1.bf16.msra.mxu0 %v1012
        %1078 = vmatprep.subr.bf16.mxu0 %v1015
        %1079 = vmatpush1.bf16.msra.mxu0 %v1014
        %1080 = vmatprep.subr.bf16.mxu0 %v1017
        %1081 = vmatpush1.bf16.msra.mxu0 %v1016
        %1082 = vmatprep.subr.bf16.mxu0 %v1019
        %1083 = vmatpush1.bf16.msra.mxu0 %v1018
        %1084 = vmatprep.subr.bf16.mxu0 %v1021
        %1085 = vmatpush1.bf16.msra.mxu0 %v1020
        %1086 = vmatprep.subr.bf16.mxu0 %v1023
        %1087 = vmatpush1.bf16.msra.mxu0 %v1022
        %1088 = vmatprep.subr.bf16.mxu0 %v1025
        %1089 = vmatpush1.bf16.msra.mxu0 %v1024
        %1090 = vmatprep.subr.bf16.mxu0 %v1027
        %1091 = vmatpush1.bf16.msra.mxu0 %v1026
        %1092 = vmatprep.subr.bf16.mxu0 %v1029
        %1093 = vmatpush1.bf16.msra.mxu0 %v1028
        %1094 = vmatprep.subr.bf16.mxu0 %v1031
        %1095 = vmatpush1.bf16.msra.mxu0 %v1030
        %1096 = vmatprep.subr.bf16.mxu0 %v1033
        %1097 = vmatpush1.bf16.msra.mxu0 %v1032
        %1098 = vmatprep.subr.bf16.mxu0 %v1035
        %1099 = vmatpush1.bf16.msra.mxu0 %v1034
        %1100 = vmatprep.mubr.bf16.mxu0 %v833
        %1101 = vmatmul.mubr.bf16.gmra.mrb[0].mxu0 %v832
        %v1102 = vpop.f32.mrb[0].mxu0
        %v1103 = vadd.f32 %v901, %v1102
        %v1104 = vpop.f32.mrb[0].mxu0
        %v1105 = vadd.f32 %v905, %v1104
        %v1106 = vpop.f32.mrb[0].mxu0
        %v1107 = vadd.f32 %v901, %v1106
        %v1108 = vpop.f32.mrb[0].mxu0
        %v1109 = vadd.f32 %v905, %v1108
        %1110 = vmatprep.mubr.bf16.mxu0 %v835
        %1111 = vmatmul.mubr.bf16.gmra.mrb[0].mxu0 %v834
        %v1112 = vpop.f32.mrb[0].mxu0
        %v1113 = vadd.f32 %v901, %v1112
        %v1114 = vpop.f32.mrb[0].mxu0
        %v1115 = vadd.f32 %v905, %v1114
        %v1116 = vpop.f32.mrb[0].mxu0
        %v1117 = vadd.f32 %v901, %v1116
        %v1118 = vpop.f32.mrb[0].mxu0
        %v1119 = vadd.f32 %v905, %v1118
        %1120 = vmatprep.mubr.bf16.mxu0 %v837
        %1121 = vmatmul.mubr.bf16.gmra.mrb[0].mxu0 %v836
        %v1122 = vpop.f32.mrb[0].mxu0
        %v1123 = vadd.f32 %v901, %v1122
        %v1124 = vpop.f32.mrb[0].mxu0
        %v1125 = vadd.f32 %v905, %v1124
        %v1126 = vpop.f32.mrb[0].mxu0
        %v1127 = vadd.f32 %v901, %v1126
        %v1128 = vpop.f32.mrb[0].mxu0
        %v1129 = vadd.f32 %v905, %v1128
        %1130 = vmatprep.mubr.bf16.mxu0 %v839
        %1131 = vmatmul.mubr.bf16.gmra.mrb[0].mxu0 %v838
        %v1132 = vpop.f32.mrb[0].mxu0
        %v1133 = vadd.f32 %v901, %v1132
        %v1134 = vpop.f32.mrb[0].mxu0
        %v1135 = vadd.f32 %v905, %v1134
        %v1136 = vpop.f32.mrb[0].mxu0
        %v1137 = vadd.f32 %v901, %v1136
        %v1138 = vpop.f32.mrb[0].mxu0
        %v1139 = vadd.f32 %v905, %v1138
        %1140 = vmatprep.mubr.bf16.mxu0 %v841
        %1141 = vmatmul.mubr.bf16.gmra.mrb[0].mxu0 %v840
        %v1142 = vpop.f32.mrb[0].mxu0
        %v1143 = vadd.f32 %v901, %v1142
        %v1144 = vpop.f32.mrb[0].mxu0
        %v1145 = vadd.f32 %v905, %v1144
        %v1146 = vpop.f32.mrb[0].mxu0
        %v1147 = vadd.f32 %v901, %v1146
        %v1148 = vpop.f32.mrb[0].mxu0
        %v1149 = vadd.f32 %v905, %v1148
        %1150 = vmatprep.mubr.bf16.mxu0 %v843
        %1151 = vmatmul.mubr.bf16.gmra.mrb[0].mxu0 %v842
        %v1152 = vpop.f32.mrb[0].mxu0
        %v1153 = vadd.f32 %v901, %v1152
        %v1154 = vpop.f32.mrb[0].mxu0
        %v1155 = vadd.f32 %v905, %v1154
        %v1156 = vpop.f32.mrb[0].mxu0
        %v1157 = vadd.f32 %v901, %v1156
        %v1158 = vpop.f32.mrb[0].mxu0
        %v1159 = vadd.f32 %v905, %v1158
        %1160 = vmatprep.mubr.bf16.mxu0 %v845
        %1161 = vmatmul.mubr.bf16.gmra.mrb[0].mxu0 %v844
        %v1162 = vpop.f32.mrb[0].mxu0
        %v1163 = vadd.f32 %v901, %v1162
        %v1164 = vpop.f32.mrb[0].mxu0
        %v1165 = vadd.f32 %v905, %v1164
        %v1166 = vpop.f32.mrb[0].mxu0
        %v1167 = vadd.f32 %v901, %v1166
        %v1168 = vpop.f32.mrb[0].mxu0
        %v1169 = vadd.f32 %v905, %v1168
        %1170 = vmatprep.mubr.bf16.mxu0 %v847
        %1171 = vmatmul.mubr.bf16.gmra.mrb[0].mxu0 %v846
        %v1172 = vpop.f32.mrb[0].mxu0
        %v1173 = vadd.f32 %v901, %v1172
        %v1174 = vpop.f32.mrb[0].mxu0
        %v1175 = vadd.f32 %v905, %v1174
        %v1176 = vpop.f32.mrb[0].mxu0
        %v1177 = vadd.f32 %v901, %v1176
        %v1178 = vpop.f32.mrb[0].mxu0
        %v1179 = vadd.f32 %v905, %v1178
        %1180 = vmatprep.mubr.bf16.mxu0 %v849
        %1181 = vmatmul.mubr.bf16.gmra.mrb[0].mxu0 %v848
        %v1182 = vpop.f32.mrb[0].mxu0
        %v1183 = vadd.f32 %v901, %v1182
        %v1184 = vpop.f32.mrb[0].mxu0
        %v1185 = vadd.f32 %v905, %v1184
        %v1186 = vpop.f32.mrb[0].mxu0
        %v1187 = vadd.f32 %v901, %v1186
        %v1188 = vpop.f32.mrb[0].mxu0
        %v1189 = vadd.f32 %v905, %v1188
        %1190 = vmatprep.mubr.bf16.mxu0 %v851
        %1191 = vmatmul.mubr.bf16.gmra.mrb[0].mxu0 %v850
        %v1192 = vpop.f32.mrb[0].mxu0
        %v1193 = vadd.f32 %v901, %v1192
        %v1194 = vpop.f32.mrb[0].mxu0
        %v1195 = vadd.f32 %v905, %v1194
        %v1196 = vpop.f32.mrb[0].mxu0
        %v1197 = vadd.f32 %v901, %v1196
        %v1198 = vpop.f32.mrb[0].mxu0
        %v1199 = vadd.f32 %v905, %v1198
        %1200 = vmatprep.mubr.bf16.mxu0 %v853
        %1201 = vmatmul.mubr.bf16.gmra.mrb[0].mxu0 %v852
        %v1202 = vpop.f32.mrb[0].mxu0
        %v1203 = vadd.f32 %v901, %v1202
        %v1204 = vpop.f32.mrb[0].mxu0
        %v1205 = vadd.f32 %v905, %v1204
        %v1206 = vpop.f32.mrb[0].mxu0
        %v1207 = vadd.f32 %v901, %v1206
        %v1208 = vpop.f32.mrb[0].mxu0
        %v1209 = vadd.f32 %v905, %v1208
        %1210 = vmatprep.mubr.bf16.mxu0 %v855
        %1211 = vmatmul.mubr.bf16.gmra.mrb[0].mxu0 %v854
        %v1212 = vpop.f32.mrb[0].mxu0
        %v1213 = vadd.f32 %v901, %v1212
        %v1214 = vpop.f32.mrb[0].mxu0
        %v1215 = vadd.f32 %v905, %v1214
        %v1216 = vpop.f32.mrb[0].mxu0
        %v1217 = vadd.f32 %v901, %v1216
        %v1218 = vpop.f32.mrb[0].mxu0
        %v1219 = vadd.f32 %v905, %v1218
        %1220 = vmatprep.mubr.bf16.mxu0 %v857
        %1221 = vmatmul.mubr.bf16.gmra.mrb[0].mxu0 %v856
        %v1222 = vpop.f32.mrb[0].mxu0
        %v1223 = vadd.f32 %v901, %v1222
        %v1224 = vpop.f32.mrb[0].mxu0
        %v1225 = vadd.f32 %v905, %v1224
        %v1226 = vpop.f32.mrb[0].mxu0
        %v1227 = vadd.f32 %v901, %v1226
        %v1228 = vpop.f32.mrb[0].mxu0
        %v1229 = vadd.f32 %v905, %v1228
        %1230 = vmatprep.mubr.bf16.mxu0 %v859
        %1231 = vmatmul.mubr.bf16.gmra.mrb[0].mxu0 %v858
        %v1232 = vpop.f32.mrb[0].mxu0
        %v1233 = vadd.f32 %v901, %v1232
        %v1234 = vpop.f32.mrb[0].mxu0
        %v1235 = vadd.f32 %v905, %v1234
        %v1236 = vpop.f32.mrb[0].mxu0
        %v1237 = vadd.f32 %v901, %v1236
        %v1238 = vpop.f32.mrb[0].mxu0
        %v1239 = vadd.f32 %v905, %v1238
        %1240 = vmatprep.mubr.bf16.mxu0 %v861
        %1241 = vmatmul.mubr.bf16.gmra.mrb[0].mxu0 %v860
        %v1242 = vpop.f32.mrb[0].mxu0
        %v1243 = vadd.f32 %v901, %v1242
        %v1244 = vpop.f32.mrb[0].mxu0
        %v1245 = vadd.f32 %v905, %v1244
        %v1246 = vpop.f32.mrb[0].mxu0
        %v1247 = vadd.f32 %v901, %v1246
        %v1248 = vpop.f32.mrb[0].mxu0
        %v1249 = vadd.f32 %v905, %v1248
        %1250 = vmatprep.mubr.bf16.mxu0 %v863
        %1251 = vmatmul.mubr.bf16.gmra.mrb[0].mxu0 %v862
        %v1252 = vpop.f32.mrb[0].mxu0
        %v1253 = vadd.f32 %v901, %v1252
        %v1254 = vpop.f32.mrb[0].mxu0
        %v1255 = vadd.f32 %v905, %v1254
        %v1256 = vpop.f32.mrb[0].mxu0
        %v1257 = vadd.f32 %v901, %v1256
        %v1258 = vpop.f32.mrb[0].mxu0
        %v1259 = vadd.f32 %v905, %v1258
        %1260 = vdwg.mxu0
        %v1261 = vadd.f32 %v1103, %v275
        %v1262 = vadd.f32 %v1105, %v276
        %v1263 = vadd.f32 %v1107, %v277
        %v1264 = vadd.f32 %v1109, %v278
        %v1265 = vadd.f32 %v1113, %v279
        %v1266 = vadd.f32 %v1115, %v280
        %v1267 = vadd.f32 %v1117, %v281
        %v1268 = vadd.f32 %v1119, %v282
        %v1269 = vadd.f32 %v1123, %v283
        %v1270 = vadd.f32 %v1125, %v284
        %v1271 = vadd.f32 %v1127, %v285
        %v1272 = vadd.f32 %v1129, %v286
        %v1273 = vadd.f32 %v1133, %v287
        %v1274 = vadd.f32 %v1135, %v288
        %v1275 = vadd.f32 %v1137, %v289
        %v1276 = vadd.f32 %v1139, %v290
        %v1277 = vadd.f32 %v1143, %v291
        %v1278 = vadd.f32 %v1145, %v292
        %v1279 = vadd.f32 %v1147, %v293
        %v1280 = vadd.f32 %v1149, %v294
        %v1281 = vadd.f32 %v1153, %v295
        %v1282 = vadd.f32 %v1155, %v296
        %v1283 = vadd.f32 %v1157, %v297
        %v1284 = vadd.f32 %v1159, %v298
        %v1285 = vadd.f32 %v1163, %v299
        %v1286 = vadd.f32 %v1165, %v300
        %v1287 = vadd.f32 %v1167, %v301
        %v1288 = vadd.f32 %v1169, %v302
        %v1289 = vadd.f32 %v1173, %v303
        %v1290 = vadd.f32 %v1175, %v304
        %v1291 = vadd.f32 %v1177, %v305
        %v1292 = vadd.f32 %v1179, %v306
        %v1293 = vadd.f32 %v1183, %v307
        %v1294 = vadd.f32 %v1185, %v308
        %v1295 = vadd.f32 %v1187, %v309
        %v1296 = vadd.f32 %v1189, %v310
        %v1297 = vadd.f32 %v1193, %v311
        %v1298 = vadd.f32 %v1195, %v312
        %v1299 = vadd.f32 %v1197, %v313
        %v1300 = vadd.f32 %v1199, %v314
        %v1301 = vadd.f32 %v1203, %v315
        %v1302 = vadd.f32 %v1205, %v316
        %v1303 = vadd.f32 %v1207, %v317
        %v1304 = vadd.f32 %v1209, %v318
        %v1305 = vadd.f32 %v1213, %v319
        %v1306 = vadd.f32 %v1215, %v320
        %v1307 = vadd.f32 %v1217, %v321
        %v1308 = vadd.f32 %v1219, %v322
        %v1309 = vadd.f32 %v1223, %v323
        %v1310 = vadd.f32 %v1225, %v324
        %v1311 = vadd.f32 %v1227, %v325
        %v1312 = vadd.f32 %v1229, %v326
        %v1313 = vadd.f32 %v1233, %v327
        %v1314 = vadd.f32 %v1235, %v328
        %v1315 = vadd.f32 %v1237, %v329
        %v1316 = vadd.f32 %v1239, %v330
        %v1317 = vadd.f32 %v1243, %v331
        %v1318 = vadd.f32 %v1245, %v332
        %v1319 = vadd.f32 %v1247, %v333
        %v1320 = vadd.f32 %v1249, %v334
        %v1321 = vadd.f32 %v1253, %v335
        %v1322 = vadd.f32 %v1255, %v336
        %v1323 = vadd.f32 %v1257, %v337
        %v1324 = vadd.f32 %v1259, %v338
        %v1325 = vmax.f32 %v1261, 0.0
        %v1326 = vmax.f32 %v1262, 0.0
        %v1327 = vmax.f32 %v1263, 0.0
        %v1328 = vmax.f32 %v1264, 0.0
        %v1329 = vmax.f32 %v1265, 0.0
        %v1330 = vmax.f32 %v1266, 0.0
        %v1331 = vmax.f32 %v1267, 0.0
        %v1332 = vmax.f32 %v1268, 0.0
        %v1333 = vmax.f32 %v1269, 0.0
        %v1334 = vmax.f32 %v1270, 0.0
        %v1335 = vmax.f32 %v1271, 0.0
        %v1336 = vmax.f32 %v1272, 0.0
        %v1337 = vmax.f32 %v1273, 0.0
        %v1338 = vmax.f32 %v1274, 0.0
        %v1339 = vmax.f32 %v1275, 0.0
        %v1340 = vmax.f32 %v1276, 0.0
        %v1341 = vmax.f32 %v1277, 0.0
        %v1342 = vmax.f32 %v1278, 0.0
        %v1343 = vmax.f32 %v1279, 0.0
        %v1344 = vmax.f32 %v1280, 0.0
        %v1345 = vmax.f32 %v1281, 0.0
        %v1346 = vmax.f32 %v1282, 0.0
        %v1347 = vmax.f32 %v1283, 0.0
        %v1348 = vmax.f32 %v1284, 0.0
        %v1349 = vmax.f32 %v1285, 0.0
        %v1350 = vmax.f32 %v1286, 0.0
        %v1351 = vmax.f32 %v1287, 0.0
        %v1352 = vmax.f32 %v1288, 0.0
        %v1353 = vmax.f32 %v1289, 0.0
        %v1354 = vmax.f32 %v1290, 0.0
        %v1355 = vmax.f32 %v1291, 0.0
        %v1356 = vmax.f32 %v1292, 0.0
        %v1357 = vmax.f32 %v1293, 0.0
        %v1358 = vmax.f32 %v1294, 0.0
        %v1359 = vmax.f32 %v1295, 0.0
        %v1360 = vmax.f32 %v1296, 0.0
        %v1361 = vmax.f32 %v1297, 0.0
        %v1362 = vmax.f32 %v1298, 0.0
        %v1363 = vmax.f32 %v1299, 0.0
        %v1364 = vmax.f32 %v1300, 0.0
        %v1365 = vmax.f32 %v1301, 0.0
        %v1366 = vmax.f32 %v1302, 0.0
        %v1367 = vmax.f32 %v1303, 0.0
        %v1368 = vmax.f32 %v1304, 0.0
        %v1369 = vmax.f32 %v1305, 0.0
        %v1370 = vmax.f32 %v1306, 0.0
        %v1371 = vmax.f32 %v1307, 0.0
        %v1372 = vmax.f32 %v1308, 0.0
        %v1373 = vmax.f32 %v1309, 0.0
        %v1374 = vmax.f32 %v1310, 0.0
        %v1375 = vmax.f32 %v1311, 0.0
        %v1376 = vmax.f32 %v1312, 0.0
        %v1377 = vmax.f32 %v1313, 0.0
        %v1378 = vmax.f32 %v1314, 0.0
        %v1379 = vmax.f32 %v1315, 0.0
        %v1380 = vmax.f32 %v1316, 0.0
        %v1381 = vmax.f32 %v1317, 0.0
        %v1382 = vmax.f32 %v1318, 0.0
        %v1383 = vmax.f32 %v1319, 0.0
        %v1384 = vmax.f32 %v1320, 0.0
        %v1385 = vmax.f32 %v1321, 0.0
        %v1386 = vmax.f32 %v1322, 0.0
        %v1387 = vmax.f32 %v1323, 0.0
        %v1388 = vmax.f32 %v1324, 0.0
        %1389 = vst [vmem:[%s272] sm:$0xff] %v1325
        %1390 = vst [vmem:[%s272 + $0x8] sm:$0xff] %v1326
        %1391 = vst [vmem:[%s272 + $0x10] sm:$0xff] %v1327
        %1392 = vst [vmem:[%s272 + $0x18] sm:$0xff] %v1328
        %1393 = vst [vmem:[%s272 + $0x20] sm:$0xff] %v1329
        %1394 = vst [vmem:[%s272 + $0x28] sm:$0xff] %v1330
        %1395 = vst [vmem:[%s272 + $0x30] sm:$0xff] %v1331
        %1396 = vst [vmem:[%s272 + $0x38] sm:$0xff] %v1332
        %1397 = vst [vmem:[%s272 + $0x40] sm:$0xff] %v1333
        %1398 = vst [vmem:[%s272 + $0x48] sm:$0xff] %v1334
        %1399 = vst [vmem:[%s272 + $0x50] sm:$0xff] %v1335
        %1400 = vst [vmem:[%s272 + $0x58] sm:$0xff] %v1336
        %1401 = vst [vmem:[%s272 + $0x60] sm:$0xff] %v1337
        %1402 = vst [vmem:[%s272 + $0x68] sm:$0xff] %v1338
        %1403 = vst [vmem:[%s272 + $0x70] sm:$0xff] %v1339
        %1404 = vst [vmem:[%s272 + $0x78] sm:$0xff] %v1340
        %1405 = vst [vmem:[%s272 + $0x80] sm:$0xff] %v1341
        %1406 = vst [vmem:[%s272 + $0x88] sm:$0xff] %v1342
        %1407 = vst [vmem:[%s272 + $0x90] sm:$0xff] %v1343
        %1408 = vst [vmem:[%s272 + $0x98] sm:$0xff] %v1344
        %1409 = vst [vmem:[%s272 + $0xa0] sm:$0xff] %v1345
        %1410 = vst [vmem:[%s272 + $0xa8] sm:$0xff] %v1346
        %1411 = vst [vmem:[%s272 + $0xb0] sm:$0xff] %v1347
        %1412 = vst [vmem:[%s272 + $0xb8] sm:$0xff] %v1348
        %1413 = vst [vmem:[%s272 + $0xc0] sm:$0xff] %v1349
        %1414 = vst [vmem:[%s272 + $0xc8] sm:$0xff] %v1350
        %1415 = vst [vmem:[%s272 + $0xd0] sm:$0xff] %v1351
        %1416 = vst [vmem:[%s272 + $0xd8] sm:$0xff] %v1352
        %1417 = vst [vmem:[%s272 + $0xe0] sm:$0xff] %v1353
        %1418 = vst [vmem:[%s272 + $0xe8] sm:$0xff] %v1354
        %1419 = vst [vmem:[%s272 + $0xf0] sm:$0xff] %v1355
        %1420 = vst [vmem:[%s272 + $0xf8] sm:$0xff] %v1356
        %1421 = vst [vmem:[%s272 + $0x100] sm:$0xff] %v1357
        %1422 = vst [vmem:[%s272 + $0x108] sm:$0xff] %v1358
        %1423 = vst [vmem:[%s272 + $0x110] sm:$0xff] %v1359
        %1424 = vst [vmem:[%s272 + $0x118] sm:$0xff] %v1360
        %1425 = vst [vmem:[%s272 + $0x120] sm:$0xff] %v1361
        %1426 = vst [vmem:[%s272 + $0x128] sm:$0xff] %v1362
        %1427 = vst [vmem:[%s272 + $0x130] sm:$0xff] %v1363
        %1428 = vst [vmem:[%s272 + $0x138] sm:$0xff] %v1364
        %1429 = vst [vmem:[%s272 + $0x140] sm:$0xff] %v1365
        %1430 = vst [vmem:[%s272 + $0x148] sm:$0xff] %v1366
        %1431 = vst [vmem:[%s272 + $0x150] sm:$0xff] %v1367
        %1432 = vst [vmem:[%s272 + $0x158] sm:$0xff] %v1368
        %1433 = vst [vmem:[%s272 + $0x160] sm:$0xff] %v1369
        %1434 = vst [vmem:[%s272 + $0x168] sm:$0xff] %v1370
        %1435 = vst [vmem:[%s272 + $0x170] sm:$0xff] %v1371
        %1436 = vst [vmem:[%s272 + $0x178] sm:$0xff] %v1372
        %1437 = vst [vmem:[%s272 + $0x180] sm:$0xff] %v1373
        %1438 = vst [vmem:[%s272 + $0x188] sm:$0xff] %v1374
        %1439 = vst [vmem:[%s272 + $0x190] sm:$0xff] %v1375
        %1440 = vst [vmem:[%s272 + $0x198] sm:$0xff] %v1376
        %1441 = vst [vmem:[%s272 + $0x1a0] sm:$0xff] %v1377
        %1442 = vst [vmem:[%s272 + $0x1a8] sm:$0xff] %v1378
        %1443 = vst [vmem:[%s272 + $0x1b0] sm:$0xff] %v1379
        %1444 = vst [vmem:[%s272 + $0x1b8] sm:$0xff] %v1380
        %1445 = vst [vmem:[%s272 + $0x1c0] sm:$0xff] %v1381
        %1446 = vst [vmem:[%s272 + $0x1c8] sm:$0xff] %v1382
        %1447 = vst [vmem:[%s272 + $0x1d0] sm:$0xff] %v1383
        %1448 = vst [vmem:[%s272 + $0x1d8] sm:$0xff] %v1384
        %1449 = vst [vmem:[%s272 + $0x1e0] sm:$0xff] %v1385
        %1450 = vst [vmem:[%s272 + $0x1e8] sm:$0xff] %v1386
        %1451 = vst [vmem:[%s272 + $0x1f0] sm:$0xff] %v1387
        %1452 = vst [vmem:[%s272 + $0x1f8] sm:$0xff] %v1388
        %s1453 = sand.u32 %s141, 1
        %s1454 = scalar_lea.sflag [#allocation4], %s1453
        %s1455 = sand.u32 %s141, 1
        %s1456 = smul.addr %s1455, 512
        %s1457 = scalar_lea.vmem [#allocation8], %s1456
        // Predicated region
        $region53: #{_residual_block.1} parent=39 // pred_check
          %p1458 = pneg %p151
        $region54: #{_residual_block.1} parent=39 // pred_check_branch
          %1460 = sbr.rel (%p1458) target = $region56
        $region55: #{_residual_block.1} parent=39 // pred_region
          %s1461 = smul.u32 32, %s23
          %s1463 = ssub.s32 8192, 8192
          %1464 = vsyncadd %s1454, %s1463
          %s1465 = smul.addr %s1461, 2
          %s1466 = smul.addr %s1465, 128
          %s1467 = scalar_lea.hbm %s5, %s1466
          %s1468 = sshll.u32 %s1457, 4
          %s1469 = int_to_ptr.vmem [resolvable:$true] %s1468
          %1474 = dma.vmem_to_hbm [thread:$0]  %s1469, 8192, %s1467, %s1454, 256, 256, 16
        $region56: #{_residual_block.1} parent=39 // pred_fallthru
          _
      $region40: #{_residual_block.1} parent=5 // pred_fallthru
        _
      %p1475 = scmp.le.s32.totalorder 2, %s18
      // Predicated region
      $region57: #{_residual_block.1} parent=5 // pred_check
        %p1476 = pneg %p1475
      $region58: #{_residual_block.1} parent=5 // pred_check_branch
        %1478 = sbr.rel (%p1476) target = $region60
      $region59: #{_residual_block.1} parent=5 // pred_region
        %s1479 = ssub.s32 %s18, 2
        // Predicated region
        $region61: #{_residual_block.1} parent=59 // pred_check
          %p1480 = pneg %p157
        $region62: #{_residual_block.1} parent=59 // pred_check_branch
          %1482 = sbr.rel (%p1480) target = $region64
        $region63: #{_residual_block.1} parent=59 // pred_region
          %s1483 = sand.u32 %s142, 1
          %s1484 = scalar_lea.sflag [#allocation4], %s1483
          %s1485 = sand.u32 %s142, 1
          %s1486 = smul.addr %s1485, 512
          %s1487 = scalar_lea.vmem [#allocation8], %s1486
          %1488 = dma.done %s1484, 8192
        $region64: #{_residual_block.1} parent=59 // pred_fallthru
          _
      $region60: #{_residual_block.1} parent=5 // pred_fallthru
        _
    $region6: #{_residual_block.1} parent=1 // loop_footer
      %s22 = sadd.s32 1, %s18
    $region7: #{_residual_block.1} parent=1 // loop_footer_branch
      %17 = sbr.rel target = $region3
    $region8: #{_residual_block.1} parent=1 // loop_exit
      _
    %1489 = vsyncpa [#allocation3], 1
    %s1490 = scalar_lea.sflag [#allocation3], 1
    %1491 = vsyncpa %s1490, 1
    %1492 = vsyncpa [#allocation6], 1
    %1493 = vsyncpa [#allocation4], 1
    %s1494 = scalar_lea.sflag [#allocation4], 1
    %1495 = vsyncpa %s1494, 1

// kernel: _residual_block.1
$region0: #{_residual_block.1}
  #allocation0 [shape = 'u32[]', space=smem, size = 0x4, offset = 0x4, fixed_abs, tag = 'smem constant byte address 0x4 - core index']
  #allocation1 [shape = 'u32[144,128]{1,0:T(1,128)}', space=vmem, size = 0x12000, scoped, tag = 'internal scratch']
  %s0 = inlined_call_operand.hbm [shape: f32[512,256], index: 0, kind: input, shape index: {}]
  %s1 = inlined_call_operand.hbm [shape: bf16[256,256], index: 1, kind: input, shape index: {}]
  %s2 = inlined_call_operand.vmem [shape: f32[1,256], index: 2, kind: input, shape index: {}]
  %s3 = inlined_call_operand.hbm [shape: bf16[256,256], index: 3, kind: input, shape index: {}]
  %s4 = inlined_call_operand.vmem [shape: f32[1,256], index: 4, kind: input, shape index: {}]
  %s5 = inlined_call_operand.hbm [shape: f32[512,256], index: 5, kind: output, shape index: {}]
  %s6 = sld [smem:[#allocation0]]
  $region65: #{_residual_block.1} parent=0
    _
  %s8 = ssub.s32 1, %s6
  %s9 = scalar_select 0, %s8, %s6
  $region1: #{_residual_block.1} parent=0
    #allocation2 [shape = 'u8[524288]{0}', space=vmem, size = 0x80000, scoped, tag = 'input window, operand 0']
    #allocation3 [shape = 's32[2]{0}', space=sflag, size = 0x8, scoped, tag = 'scoped memory for _residual_block.1']
    #allocation4 [shape = 's32[2]{0}', space=sflag, size = 0x8, scoped, tag = 'scoped memory for _residual_block.1']
    #allocation5 [shape = 'u8[131072]{0}', space=vmem, size = 0x20000, scoped, tag = 'input window, operand 1, single buffered']
    #allocation6 [shape = 's32[1]{0}', space=sflag, size = 0x4, scoped, tag = 'scoped memory for _residual_block.1']
    #allocation7 [shape = 'u8[131072]{0}', space=vmem, size = 0x20000, scoped, tag = 'input window, operand 3, single buffered']
    #allocation8 [shape = 'u8[524288]{0}', space=vmem, size = 0x80000, scoped, tag = 'output window, operand 0']
    %10 = vsyncpa [#allocation3], 0
    %s11 = scalar_lea.sflag [#allocation3], 1
    %12 = vsyncpa %s11, 0
    %13 = vsyncpa [#allocation6], 0
    %14 = vsyncpa [#allocation4], 0
    %s15 = scalar_lea.sflag [#allocation4], 1
    %16 = vsyncpa %s15, 0
    loop: start=0, step=1, limit=4
    $region2: #{_residual_block.1} parent=1 // loop_pre_header
      _
    $region3: #{_residual_block.1} parent=1 // loop_header
      %s18 = sphi 0, %s22
      %p19 = scmp.ge.s32.totalorder %s18, 4
      %s28 = sphi 0, %s30
      %s31 = sphi 0, %s28
      %s32 = sphi 0, %s31
      %s48 = sphi 0, %s32
      %s52 = sphi 0, %s52
      %s54 = sphi 0, %s52
      %s55 = sphi 0, %s54
      %s69 = sphi 0, %s55
      %s73 = sphi 0, %s73
      %s75 = sphi 0, %s73
      %s76 = sphi 0, %s75
      %s90 = sphi 0, %s76
      %s94 = sphi 0, %s94
      %s96 = sphi 0, %s94
      %s97 = sphi 0, %s96
      %s111 = sphi 0, %s97
      %s115 = sphi 0, %s115
      %s117 = sphi 0, %s115
      %s118 = sphi 0, %s117
      %s132 = sphi 0, %s118
      %s138 = sphi 0, %s140
      %s141 = sphi 0, %s138
      %s142 = sphi 0, %s141
      %s158 = sphi 0, %s142
    $region4: #{_residual_block.1} parent=1 // loop_header_branch
      %21 = sbr.rel (%p19) target = $region8
    $region5: #{_residual_block.1} parent=1 // loop_body
      %s23 = ssub.s32 %s18, 1
      %s24 = ssub.s32 %s18, 2
      %s25 = sadd.s32 %s18, 1
      %s26 = ssub.s32 %s18, %s25
      %p27 = scmp.eq.s32.totalorder %s26, 0
      %s29 = sadd.s32 %s28, 1
      %s30 = scalar_select %p27, %s28, %s29
      %p33 = pneg %p27
      %p34 = scmp.eq.s32.totalorder %s18, 1
      %p35 = por %p33, %p34
      %p36 = scmp.ne.s32.totalorder %s28, %s31
      %p37 = scmp.eq.s32.totalorder %s18, 0
      %p38 = por %p36, %p37
      %p39 = scmp.ne.s32.totalorder %s28, %s31
      %p40 = scmp.eq.s32.totalorder %s23, 1
      %p41 = por %p39, %p40
      %p42 = scmp.ne.s32.totalorder %s31, %s32
      %p43 = scmp.eq.s32.totalorder %s23, 0
      %p44 = por %p42, %p43
      %p45 = scmp.ne.s32.totalorder %s31, %s32
      %p46 = scmp.eq.s32.totalorder %s24, 1
      %p47 = por %p45, %p46
      %p49 = scmp.ne.s32.totalorder %s32, %s48
      %p50 = scmp.eq.s32.totalorder %s24, 0
      %p51 = por %p49, %p50
      %s53 = sadd.s32 %s52, 1
      %p56 = scmp.eq.s32.totalorder %s18, 1
      %p57 = scmp.ne.s32.totalorder %s52, %s54
      %p58 = scmp.eq.s32.totalorder %s18, 0
      %p59 = por %p57, %p58
      %p60 = scmp.ne.s32.totalorder %s52, %s54
      %p61 = scmp.eq.s32.totalorder %s23, 1
      %p62 = por %p60, %p61
      %p63 = scmp.ne.s32.totalorder %s54, %s55
      %p64 = scmp.eq.s32.totalorder %s23, 0
      %p65 = por %p63, %p64
      %p66 = scmp.ne.s32.totalorder %s54, %s55
      %p67 = scmp.eq.s32.totalorder %s24, 1
      %p68 = por %p66, %p67
      %p70 = scmp.ne.s32.totalorder %s55, %s69
      %p71 = scmp.eq.s32.totalorder %s24, 0
      %p72 = por %p70, %p71
      %s74 = sadd.s32 %s73, 1
      %p77 = scmp.eq.s32.totalorder %s18, 1
      %p78 = scmp.ne.s32.totalorder %s73, %s75
      %p79 = scmp.eq.s32.totalorder %s18, 0
      %p80 = por %p78, %p79
      %p81 = scmp.ne.s32.totalorder %s73, %s75
      %p82 = scmp.eq.s32.totalorder %s23, 1
      %p83 = por %p81, %p82
      %p84 = scmp.ne.s32.totalorder %s75, %s76
      %p85 = scmp.eq.s32.totalorder %s23, 0
      %p86 = por %p84, %p85
      %p87 = scmp.ne.s32.totalorder %s75, %s76
      %p88 = scmp.eq.s32.totalorder %s24, 1
      %p89 = por %p87, %p88
      %p91 = scmp.ne.s32.totalorder %s76, %s90
      %p92 = scmp.eq.s32.totalorder %s24, 0
      %p93 = por %p91, %p92
      %s95 = sadd.s32 %s94, 1
      %p98 = scmp.eq.s32.totalorder %s18, 1
      %p99 = scmp.ne.s32.totalorder %s94, %s96
      %p100 = scmp.eq.s32.totalorder %s18, 0
      %p101 = por %p99, %p100
      %p102 = scmp.ne.s32.totalorder %s94, %s96
      %p103 = scmp.eq.s32.totalorder %s23, 1
      %p104 = por %p102, %p103
      %p105 = scmp.ne.s32.totalorder %s96, %s97
      %p106 = scmp.eq.s32.totalorder %s23, 0
      %p107 = por %p105, %p106
      %p108 = scmp.ne.s32.totalorder %s96, %s97
      %p109 = scmp.eq.s32.totalorder %s24, 1
      %p110 = por %p108, %p109
      %p112 = scmp.ne.s32.totalorder %s97, %s111
      %p113 = scmp.eq.s32.totalorder %s24, 0
      %p114 = por %p112, %p113
      %s116 = sadd.s32 %s115, 1
      %p119 = scmp.eq.s32.totalorder %s18, 1
      %p120 = scmp.ne.s32.totalorder %s115, %s117
      %p121 = scmp.eq.s32.totalorder %s18, 0
      %p122 = por %p120, %p121
      %p123 = scmp.ne.s32.totalorder %s115, %s117
      %p124 = scmp.eq.s32.totalorder %s23, 1
      %p125 = por %p123, %p124
      %p126 = scmp.ne.s32.totalorder %s117, %s118
      %p127 = scmp.eq.s32.totalorder %s23, 0
      %p128 = por %p126, %p127
      %p129 = scmp.ne.s32.totalorder %s117, %s118
      %p130 = scmp.eq.s32.totalorder %s24, 1
      %p131 = por %p129, %p130
      %p133 = scmp.ne.s32.totalorder %s118, %s132
      %p134 = scmp.eq.s32.totalorder %s24, 0
      %p135 = por %p133, %p134
      %s136 = ssub.s32 %s18, %s25
      %p137 = scmp.eq.s32.totalorder %s136, 0
      %s139 = sadd.s32 %s138, 1
      %s140 = scalar_select %p137, %s138, %s139
      %p143 = pneg %p137
      %p144 = scmp.eq.s32.totalorder %s18, 1
      %p145 = por %p143, %p144
      %p146 = scmp.ne.s32.totalorder %s138, %s141
      %p147 = scmp.eq.s32.totalorder %s18, 0
      %p148 = por %p146, %p147
      %p149 = scmp.ne.s32.totalorder %s138, %s141
      %p150 = scmp.eq.s32.totalorder %s23, 1
      %p151 = por %p149, %p150
      %p152 = scmp.ne.s32.totalorder %s141, %s142
      %p153 = scmp.eq.s32.totalorder %s23, 0
      %p154 = por %p152, %p153
      %p155 = scmp.ne.s32.totalorder %s141, %s142
      %p156 = scmp.eq.s32.totalorder %s24, 1
      %p157 = por %p155, %p156
      %p159 = scmp.ne.s32.totalorder %s142, %s158
      %p160 = scmp.eq.s32.totalorder %s24, 0
      %p161 = por %p159, %p160
      %p162 = scmp.le.s32.totalorder 1, %s18
      %p163 = scmp.lt.s32.totalorder %s18, 3
      %p164 = pnand %p162, %p163
      %p165 = pneg %p164
      // Predicated region
      $region9: #{_residual_block.1} parent=5 // pred_check
        _
      $region10: #{_residual_block.1} parent=5 // pred_check_branch
        %167 = sbr.rel (%p164) target = $region12
      $region11: #{_residual_block.1} parent=5 // pred_region
        %s168 = ssub.s32 %s18, 1
        // Predicated region
        $region13: #{_residual_block.1} parent=11 // pred_check
          %p169 = pneg %p65
        $region14: #{_residual_block.1} parent=11 // pred_check_branch
          %171 = sbr.rel (%p169) target = $region16
        $region15: #{_residual_block.1} parent=11 // pred_region
          %s173 = ssub.s32 4096, 4096
          %174 = vsyncadd [#allocation6], %s173
          %s175 = sshll.u32 [#allocation5], 4
          %s176 = int_to_ptr.vmem [resolvable:$true] %s175
          %181 = dma.hbm_to_vmem [thread:$0]  %s1, 4096, %s176, [#allocation6], 128, 128, 8
        $region16: #{_residual_block.1} parent=11 // pred_fallthru
          _
        // Predicated region
        $region17: #{_residual_block.1} parent=11 // pred_check
          %p182 = pneg %p86
        $region18: #{_residual_block.1} parent=11 // pred_check_branch
          %184 = sbr.rel (%p182) target = $region20
        $region19: #{_residual_block.1} parent=11 // pred_region
          _
        $region20: #{_residual_block.1} parent=11 // pred_fallthru
          _
        // Predicated region
        $region21: #{_residual_block.1} parent=11 // pred_check
          %p185 = pneg %p107
        $region22: #{_residual_block.1} parent=11 // pred_check_branch
          %187 = sbr.rel (%p185) target = $region24
        $region23: #{_residual_block.1} parent=11 // pred_region
          %s189 = ssub.s32 4096, 4096
          %190 = vsyncadd [#allocation6], %s189
          %s191 = sshll.u32 [#allocation7], 4
          %s192 = int_to_ptr.vmem [resolvable:$true] %s191
          %197 = dma.hbm_to_vmem [thread:$0]  %s3, 4096, %s192, [#allocation6], 128, 128, 8
        $region24: #{_residual_block.1} parent=11 // pred_fallthru
          _
        // Predicated region
        $region25: #{_residual_block.1} parent=11 // pred_check
          %p198 = pneg %p128
        $region26: #{_residual_block.1} parent=11 // pred_check_branch
          %200 = sbr.rel (%p198) target = $region28
        $region27: #{_residual_block.1} parent=11 // pred_region
          _
        $region28: #{_residual_block.1} parent=11 // pred_fallthru
          _
      $region12: #{_residual_block.1} parent=5 // pred_fallthru
        _
      %p201 = scmp.lt.s32.totalorder %s18, 2
      // Predicated region
      $region29: #{_residual_block.1} parent=5 // pred_check
        %p202 = pneg %p201
      $region30: #{_residual_block.1} parent=5 // pred_check_branch
        %204 = sbr.rel (%p202) target = $region32
      $region31: #{_residual_block.1} parent=5 // pred_region
        // Predicated region
        $region33: #{_residual_block.1} parent=31 // pred_check
          %p205 = pneg %p38
        $region34: #{_residual_block.1} parent=31 // pred_check_branch
          %207 = sbr.rel (%p205) target = $region36
        $region35: #{_residual_block.1} parent=31 // pred_region
          %s208 = sand.u32 %s28, 1
          %s209 = scalar_lea.sflag [#allocation3], %s208
          %s210 = sand.u32 %s28, 1
          %s211 = smul.addr %s210, 512
          %s212 = scalar_lea.vmem [#allocation2], %s211
          %s213 = smul.u32 32, %s18
          %s215 = ssub.s32 8192, 8192
          %216 = vsyncadd %s209, %s215
          %s217 = smul.addr %s213, 2
          %s218 = smul.addr %s217, 128
          %s219 = scalar_lea.hbm %s0, %s218
          %s220 = sshll.u32 %s212, 4
          %s221 = int_to_ptr.vmem [resolvable:$true] %s220
          %226 = dma.hbm_to_vmem [thread:$0]  %s219, 8192, %s221, %s209, 256, 256, 16
        $region36: #{_residual_block.1} parent=31 // pred_fallthru
          _
      $region32: #{_residual_block.1} parent=5 // pred_fallthru
        _
      %p227 = scmp.le.s32.totalorder 1, %s18
      %p228 = scmp.lt.s32.totalorder %s18, 3
      %p229 = pnand %p227, %p228
      %p230 = pneg %p229
      // Predicated region
      $region37: #{_residual_block.1} parent=5 // pred_check
        _
      $region38: #{_residual_block.1} parent=5 // pred_check_branch
        %232 = sbr.rel (%p229) target = $region40
      $region39: #{_residual_block.1} parent=5 // pred_region
        %s233 = ssub.s32 %s18, 1
        %s234 = sand.u32 %s31, 1
        %s235 = scalar_lea.sflag [#allocation3], %s234
        %s236 = sand.u32 %s31, 1
        %s237 = smul.addr %s236, 512
        %s238 = scalar_lea.vmem [#allocation2], %s237
        // Predicated region
        $region41: #{_residual_block.1} parent=39 // pred_check
          %p239 = pneg %p44
        $region42: #{_residual_block.1} parent=39 // pred_check_branch
          %241 = sbr.rel (%p239) target = $region44
        $region43: #{_residual_block.1} parent=39 // pred_region
          %242 = dma.done %s235, 8192
        $region44: #{_residual_block.1} parent=39 // pred_fallthru
          _
        // Predicated region
        $region45: #{_residual_block.1} parent=39 // pred_check
          %p243 = pneg %p65
        $region46: #{_residual_block.1} parent=39 // pred_check_branch
          %245 = sbr.rel (%p243) target = $region48
        $region47: #{_residual_block.1} parent=39 // pred_region
          %246 = dma.done [#allocation6], 4096
        $region48: #{_residual_block.1} parent=39 // pred_fallthru
          _
        // Predicated region
        $region49: #{_residual_block.1} parent=39 // pred_check
          %p247 = pneg %p107
        $region50: #{_residual_block.1} parent=39 // pred_check_branch
          %249 = sbr.rel (%p247) target = $region52
        $region51: #{_residual_block.1} parent=39 // pred_region
          %250 = dma.done [#allocation6], 4096
        $region52: #{_residual_block.1} parent=39 // pred_fallthru
          _
        %s251 = sand.u32 %s31, 1
        %s252 = scalar_lea.sflag [#allocation3], %s251
        %s253 = sand.u32 %s31, 1
        %s254 = smul.addr %s253, 512
        %s255 = scalar_lea.vmem [#allocation2], %s254
        %p256 = pneg %p44
        %p257 = pneg %p41
        %p258 = pneg %p65
        %p259 = pneg %p62
        %p260 = pneg %p86
        %p261 = pneg %p83
        %p262 = pneg %p107
        %p263 = pneg %p104
        %p264 = pneg %p128
        %p265 = pneg %p125
        %p266 = pneg %p154
        %p267 = pneg %p151
        %s268 = sand.u32 %s141, 1
        %s269 = scalar_lea.sflag [#allocation4], %s268
        %s270 = sand.u32 %s141, 1
        %s271 = smul.addr %s270, 512
        %s272 = scalar_lea.vmem [#allocation8], %s271
        %s273 = smul.u32 32, %s23
        %s274 = smul.u32 32, %s23
        %v275 = vld [vmem:[%s238] sm:$0xff]
        %v276 = vld [vmem:[%s238 + $0x8] sm:$0xff]
        %v277 = vld [vmem:[%s238 + $0x10] sm:$0xff]
        %v278 = vld [vmem:[%s238 + $0x18] sm:$0xff]
        %v279 = vld [vmem:[%s238 + $0x20] sm:$0xff]
        %v280 = vld [vmem:[%s238 + $0x28] sm:$0xff]
        %v281 = vld [vmem:[%s238 + $0x30] sm:$0xff]
        %v282 = vld [vmem:[%s238 + $0x38] sm:$0xff]
        %v283 = vld [vmem:[%s238 + $0x40] sm:$0xff]
        %v284 = vld [vmem:[%s238 + $0x48] sm:$0xff]
        %v285 = vld [vmem:[%s238 + $0x50] sm:$0xff]
        %v286 = vld [vmem:[%s238 + $0x58] sm:$0xff]
        %v287 = vld [vmem:[%s238 + $0x60] sm:$0xff]
        %v288 = vld [vmem:[%s238 + $0x68] sm:$0xff]
        %v289 = vld [vmem:[%s238 + $0x70] sm:$0xff]
        %v290 = vld [vmem:[%s238 + $0x78] sm:$0xff]
        %v291 = vld [vmem:[%s238 + $0x80] sm:$0xff]
        %v292 = vld [vmem:[%s238 + $0x88] sm:$0xff]
        %v293 = vld [vmem:[%s238 + $0x90] sm:$0xff]
        %v294 = vld [vmem:[%s238 + $0x98] sm:$0xff]
        %v295 = vld [vmem:[%s238 + $0xa0] sm:$0xff]
        %v296 = vld [vmem:[%s238 + $0xa8] sm:$0xff]
        %v297 = vld [vmem:[%s238 + $0xb0] sm:$0xff]
        %v298 = vld [vmem:[%s238 + $0xb8] sm:$0xff]
        %v299 = vld [vmem:[%s238 + $0xc0] sm:$0xff]
        %v300 = vld [vmem:[%s238 + $0xc8] sm:$0xff]
        %v301 = vld [vmem:[%s238 + $0xd0] sm:$0xff]
        %v302 = vld [vmem:[%s238 + $0xd8] sm:$0xff]
        %v303 = vld [vmem:[%s238 + $0xe0] sm:$0xff]
        %v304 = vld [vmem:[%s238 + $0xe8] sm:$0xff]
        %v305 = vld [vmem:[%s238 + $0xf0] sm:$0xff]
        %v306 = vld [vmem:[%s238 + $0xf8] sm:$0xff]
        %v307 = vld [vmem:[%s238 + $0x100] sm:$0xff]
        %v308 = vld [vmem:[%s238 + $0x108] sm:$0xff]
        %v309 = vld [vmem:[%s238 + $0x110] sm:$0xff]
        %v310 = vld [vmem:[%s238 + $0x118] sm:$0xff]
        %v311 = vld [vmem:[%s238 + $0x120] sm:$0xff]
        %v312 = vld [vmem:[%s238 + $0x128] sm:$0xff]
        %v313 = vld [vmem:[%s238 + $0x130] sm:$0xff]
        %v314 = vld [vmem:[%s238 + $0x138] sm:$0xff]
        %v315 = vld [vmem:[%s238 + $0x140] sm:$0xff]
        %v316 = vld [vmem:[%s238 + $0x148] sm:$0xff]
        %v317 = vld [vmem:[%s238 + $0x150] sm:$0xff]
        %v318 = vld [vmem:[%s238 + $0x158] sm:$0xff]
        %v319 = vld [vmem:[%s238 + $0x160] sm:$0xff]
        %v320 = vld [vmem:[%s238 + $0x168] sm:$0xff]
        %v321 = vld [vmem:[%s238 + $0x170] sm:$0xff]
        %v322 = vld [vmem:[%s238 + $0x178] sm:$0xff]
        %v323 = vld [vmem:[%s238 + $0x180] sm:$0xff]
        %v324 = vld [vmem:[%s238 + $0x188] sm:$0xff]
        %v325 = vld [vmem:[%s238 + $0x190] sm:$0xff]
        %v326 = vld [vmem:[%s238 + $0x198] sm:$0xff]
        %v327 = vld [vmem:[%s238 + $0x1a0] sm:$0xff]
        %v328 = vld [vmem:[%s238 + $0x1a8] sm:$0xff]
        %v329 = vld [vmem:[%s238 + $0x1b0] sm:$0xff]
        %v330 = vld [vmem:[%s238 + $0x1b8] sm:$0xff]
        %v331 = vld [vmem:[%s238 + $0x1c0] sm:$0xff]
        %v332 = vld [vmem:[%s238 + $0x1c8] sm:$0xff]
        %v333 = vld [vmem:[%s238 + $0x1d0] sm:$0xff]
        %v334 = vld [vmem:[%s238 + $0x1d8] sm:$0xff]
        %v335 = vld [vmem:[%s238 + $0x1e0] sm:$0xff]
        %v336 = vld [vmem:[%s238 + $0x1e8] sm:$0xff]
        %v337 = vld [vmem:[%s238 + $0x1f0] sm:$0xff]
        %v338 = vld [vmem:[%s238 + $0x1f8] sm:$0xff]
        %v339 = vpack.c.bf16 %v277, %v275
        %v340 = vpack.c.bf16 %v278, %v276
        %v341 = vpack.c.bf16 %v281, %v279
        %v342 = vpack.c.bf16 %v282, %v280
        %v343 = vpack.c.bf16 %v285, %v283
        %v344 = vpack.c.bf16 %v286, %v284
        %v345 = vpack.c.bf16 %v289, %v287
        %v346 = vpack.c.bf16 %v290, %v288
        %v347 = vpack.c.bf16 %v293, %v291
        %v348 = vpack.c.bf16 %v294, %v292
        %v349 = vpack.c.bf16 %v297, %v295
        %v350 = vpack.c.bf16 %v298, %v296
        %v351 = vpack.c.bf16 %v301, %v299
        %v352 = vpack.c.bf16 %v302, %v300
        %v353 = vpack.c.bf16 %v305, %v303
        %v354 = vpack.c.bf16 %v306, %v304
        %v355 = vpack.c.bf16 %v309, %v307
        %v356 = vpack.c.bf16 %v310, %v308
        %v357 = vpack.c.bf16 %v313, %v311
        %v358 = vpack.c.bf16 %v314, %v312
        %v359 = vpack.c.bf16 %v317, %v315
        %v360 = vpack.c.bf16 %v318, %v316
        %v361 = vpack.c.bf16 %v321, %v319
        %v362 = vpack.c.bf16 %v322, %v320
        %v363 = vpack.c.bf16 %v325, %v323
        %v364 = vpack.c.bf16 %v326, %v324
        %v365 = vpack.c.bf16 %v329, %v327
        %v366 = vpack.c.bf16 %v330, %v328
        %v367 = vpack.c.bf16 %v333, %v331
        %v368 = vpack.c.bf16 %v334, %v332
        %v369 = vpack.c.bf16 %v337, %v335
        %v370 = vpack.c.bf16 %v338, %v336
        %v371 = vld [vmem:[#allocation5] sm:$0xff]
        %v372 = vld [vmem:[#allocation5 + $0x8] sm:$0xff]
        %v373 = vld [vmem:[#allocation5 + $0x10] sm:$0xff]
        %v374 = vld [vmem:[#allocation5 + $0x18] sm:$0xff]
        %v375 = vld [vmem:[#allocation5 + $0x20] sm:$0xff]
        %v376 = vld [vmem:[#allocation5 + $0x28] sm:$0xff]
        %v377 = vld [vmem:[#allocation5 + $0x30] sm:$0xff]
        %v378 = vld [vmem:[#allocation5 + $0x38] sm:$0xff]
        %v379 = vld [vmem:[#allocation5 + $0x40] sm:$0xff]
        %v380 = vld [vmem:[#allocation5 + $0x48] sm:$0xff]
        %v381 = vld [vmem:[#allocation5 + $0x50] sm:$0xff]
        %v382 = vld [vmem:[#allocation5 + $0x58] sm:$0xff]
        %v383 = vld [vmem:[#allocation5 + $0x60] sm:$0xff]
        %v384 = vld [vmem:[#allocation5 + $0x68] sm:$0xff]
        %v385 = vld [vmem:[#allocation5 + $0x70] sm:$0xff]
        %v386 = vld [vmem:[#allocation5 + $0x78] sm:$0xff]
        %v387 = vld [vmem:[#allocation5 + $0x80] sm:$0xff]
        %v388 = vld [vmem:[#allocation5 + $0x88] sm:$0xff]
        %v389 = vld [vmem:[#allocation5 + $0x90] sm:$0xff]
        %v390 = vld [vmem:[#allocation5 + $0x98] sm:$0xff]
        %v391 = vld [vmem:[#allocation5 + $0xa0] sm:$0xff]
        %v392 = vld [vmem:[#allocation5 + $0xa8] sm:$0xff]
        %v393 = vld [vmem:[#allocation5 + $0xb0] sm:$0xff]
        %v394 = vld [vmem:[#allocation5 + $0xb8] sm:$0xff]
        %v395 = vld [vmem:[#allocation5 + $0xc0] sm:$0xff]
        %v396 = vld [vmem:[#allocation5 + $0xc8] sm:$0xff]
        %v397 = vld [vmem:[#allocation5 + $0xd0] sm:$0xff]
        %v398 = vld [vmem:[#allocation5 + $0xd8] sm:$0xff]
        %v399 = vld [vmem:[#allocation5 + $0xe0] sm:$0xff]
        %v400 = vld [vmem:[#allocation5 + $0xe8] sm:$0xff]
        %v401 = vld [vmem:[#allocation5 + $0xf0] sm:$0xff]
        %v402 = vld [vmem:[#allocation5 + $0xf8] sm:$0xff]
        %v403 = vld [vmem:[%s2] sm:$0x3]
        %v405 = vlaneseq
        %v406 = vshrl.u32 %v405, 7
        %v407 = vsub.s32 0, %v406
        %v408 = vrot.slane %v403, %v407
        %v409 = vlaneseq
        %v410 = vshrl.u32 %v409, 7
        %v411 = vsub.s32 1, %v410
        %v412 = vrot.slane %v403, %v411
        %v447 = vunpack.c.l.b16 %v371
        %v448 = vunpack.c.h.b16 %v371
        %v449 = vunpack.c.l.b16 %v372
        %v450 = vunpack.c.h.b16 %v372
        %v451 = vunpack.c.l.b16 %v373
        %v452 = vunpack.c.h.b16 %v373
        %v453 = vunpack.c.l.b16 %v374
        %v454 = vunpack.c.h.b16 %v374
        %v455 = vunpack.c.l.b16 %v375
        %v456 = vunpack.c.h.b16 %v375
        %v457 = vunpack.c.l.b16 %v376
        %v458 = vunpack.c.h.b16 %v376
        %v459 = vunpack.c.l.b16 %v377
        %v460 = vunpack.c.h.b16 %v377
        %v461 = vunpack.c.l.b16 %v378
        %v462 = vunpack.c.h.b16 %v378
        %v463 = vunpack.c.l.b16 %v379
        %v464 = vunpack.c.h.b16 %v379
        %v465 = vunpack.c.l.b16 %v380
        %v466 = vunpack.c.h.b16 %v380
        %v467 = vunpack.c.l.b16 %v381
        %v468 = vunpack.c.h.b16 %v381
        %v469 = vunpack.c.l.b16 %v382
        %v470 = vunpack.c.h.b16 %v382
        %v471 = vunpack.c.l.b16 %v383
        %v472 = vunpack.c.h.b16 %v383
        %v473 = vunpack.c.l.b16 %v384
        %v474 = vunpack.c.h.b16 %v384
        %v475 = vunpack.c.l.b16 %v385
        %v476 = vunpack.c.h.b16 %v385
        %v477 = vunpack.c.l.b16 %v386
        %v478 = vunpack.c.h.b16 %v386
        %v479 = vunpack.c.l.b16 %v387
        %v480 = vunpack.c.h.b16 %v387
        %v481 = vunpack.c.l.b16 %v388
        %v482 = vunpack.c.h.b16 %v388
        %v483 = vunpack.c.l.b16 %v389
        %v484 = vunpack.c.h.b16 %v389
        %v485 = vunpack.c.l.b16 %v390
        %v486 = vunpack.c.h.b16 %v390
        %v487 = vunpack.c.l.b16 %v391
        %v488 = vunpack.c.h.b16 %v391
        %v489 = vunpack.c.l.b16 %v392
        %v490 = vunpack.c.h.b16 %v392
        %v491 = vunpack.c.l.b16 %v393
        %v492 = vunpack.c.h.b16 %v393
        %v493 = vunpack.c.l.b16 %v394
        %v494 = vunpack.c.h.b16 %v394
        %v495 = vunpack.c.l.b16 %v395
        %v496 = vunpack.c.h.b16 %v395
        %v497 = vunpack.c.l.b16 %v396
        %v498 = vunpack.c.h.b16 %v396
        %v499 = vunpack.c.l.b16 %v397
        %v500 = vunpack.c.h.b16 %v397
        %v501 = vunpack.c.l.b16 %v398
        %v502 = vunpack.c.h.b16 %v398
        %v503 = vunpack.c.l.b16 %v399
        %v504 = vunpack.c.h.b16 %v399
        %v505 = vunpack.c.l.b16 %v400
        %v506 = vunpack.c.h.b16 %v400
        %v507 = vunpack.c.l.b16 %v401
        %v508 = vunpack.c.h.b16 %v401
        %v509 = vunpack.c.l.b16 %v402
        %v510 = vunpack.c.h.b16 %v402
        %v511 = vpack.c.b16 %v449, %v447
        %v512 = vpack.c.b16 %v450, %v448
        %v513 = vpack.c.b16 %v453, %v451
        %v514 = vpack.c.b16 %v454, %v452
        %v515 = vpack.c.b16 %v457, %v455
        %v516 = vpack.c.b16 %v458, %v456
        %v517 = vpack.c.b16 %v461, %v459
        %v518 = vpack.c.b16 %v462, %v460
        %v519 = vpack.c.b16 %v465, %v463
        %v520 = vpack.c.b16 %v466, %v464
        %v521 = vpack.c.b16 %v469, %v467
        %v522 = vpack.c.b16 %v470, %v468
        %v523 = vpack.c.b16 %v473, %v471
        %v524 = vpack.c.b16 %v474, %v472
        %v525 = vpack.c.b16 %v477, %v475
        %v526 = vpack.c.b16 %v478, %v476
        %v527 = vpack.c.b16 %v481, %v479
        %v528 = vpack.c.b16 %v482, %v480
        %v529 = vpack.c.b16 %v485, %v483
        %v530 = vpack.c.b16 %v486, %v484
        %v531 = vpack.c.b16 %v489, %v487
        %v532 = vpack.c.b16 %v490, %v488
        %v533 = vpack.c.b16 %v493, %v491
        %v534 = vpack.c.b16 %v494, %v492
        %v535 = vpack.c.b16 %v497, %v495
        %v536 = vpack.c.b16 %v498, %v496
        %v537 = vpack.c.b16 %v501, %v499
        %v538 = vpack.c.b16 %v502, %v500
        %v539 = vpack.c.b16 %v505, %v503
        %v540 = vpack.c.b16 %v506, %v504
        %v541 = vpack.c.b16 %v509, %v507
        %v542 = vpack.c.b16 %v510, %v508
        %575 = vmatprep.subr.bf16.mxu0 %v512
        %576 = vmatpush1.bf16.msra.mxu0 %v511
        %577 = vmatprep.subr.bf16.mxu0 %v514
        %578 = vmatpush1.bf16.msra.mxu0 %v513
        %579 = vmatprep.subr.bf16.mxu0 %v516
        %580 = vmatpush1.bf16.msra.mxu0 %v515
        %581 = vmatprep.subr.bf16.mxu0 %v518
        %582 = vmatpush1.bf16.msra.mxu0 %v517
        %583 = vmatprep.subr.bf16.mxu0 %v520
        %584 = vmatpush1.bf16.msra.mxu0 %v519
        %585 = vmatprep.subr.bf16.mxu0 %v522
        %586 = vmatpush1.bf16.msra.mxu0 %v521
        %587 = vmatprep.subr.bf16.mxu0 %v524
        %588 = vmatpush1.bf16.msra.mxu0 %v523
        %589 = vmatprep.subr.bf16.mxu0 %v526
        %590 = vmatpush1.bf16.msra.mxu0 %v525
        %591 = vmatprep.subr.bf16.mxu0 %v528
        %592 = vmatpush1.bf16.msra.mxu0 %v527
        %593 = vmatprep.subr.bf16.mxu0 %v530
        %594 = vmatpush1.bf16.msra.mxu0 %v529
        %595 = vmatprep.subr.bf16.mxu0 %v532
        %596 = vmatpush1.bf16.msra.mxu0 %v531
        %597 = vmatprep.subr.bf16.mxu0 %v534
        %598 = vmatpush1.bf16.msra.mxu0 %v533
        %599 = vmatprep.subr.bf16.mxu0 %v536
        %600 = vmatpush1.bf16.msra.mxu0 %v535
        %601 = vmatprep.subr.bf16.mxu0 %v538
        %602 = vmatpush1.bf16.msra.mxu0 %v537
        %603 = vmatprep.subr.bf16.mxu0 %v540
        %604 = vmatpush1.bf16.msra.mxu0 %v539
        %605 = vmatprep.subr.bf16.mxu0 %v542
        %606 = vmatpush1.bf16.msra.mxu0 %v541
        %607 = vmatprep.mubr.bf16.mxu0 %v340
        %608 = vmatmul.mubr.bf16.gmra.mrb[0].mxu0 %v339
        %v609 = vpop.f32.mrb[0].mxu0
        %v610 = vadd.f32 %v408, %v609
        %v611 = vpop.f32.mrb[0].mxu0
        %v612 = vadd.f32 %v412, %v611
        %v613 = vpop.f32.mrb[0].mxu0
        %v614 = vadd.f32 %v408, %v613
        %v615 = vpop.f32.mrb[0].mxu0
        %v616 = vadd.f32 %v412, %v615
        %617 = vmatprep.mubr.bf16.mxu0 %v342
        %618 = vmatmul.mubr.bf16.gmra.mrb[0].mxu0 %v341
        %v619 = vpop.f32.mrb[0].mxu0
        %v620 = vadd.f32 %v408, %v619
        %v621 = vpop.f32.mrb[0].mxu0
        %v622 = vadd.f32 %v412, %v621
        %v623 = vpop.f32.mrb[0].mxu0
        %v624 = vadd.f32 %v408, %v623
        %v625 = vpop.f32.mrb[0].mxu0
        %v626 = vadd.f32 %v412, %v625
        %627 = vmatprep.mubr.bf16.mxu0 %v344
        %628 = vmatmul.mubr.bf16.gmra.mrb[0].mxu0 %v343
        %v629 = vpop.f32.mrb[0].mxu0
        %v630 = vadd.f32 %v408, %v629
        %v631 = vpop.f32.mrb[0].mxu0
        %v632 = vadd.f32 %v412, %v631
        %v633 = vpop.f32.mrb[0].mxu0
        %v634 = vadd.f32 %v408, %v633
        %v635 = vpop.f32.mrb[0].mxu0
        %v636 = vadd.f32 %v412, %v635
        %637 = vmatprep.mubr.bf16.mxu0 %v346
        %638 = vmatmul.mubr.bf16.gmra.mrb[0].mxu0 %v345
        %v639 = vpop.f32.mrb[0].mxu0
        %v640 = vadd.f32 %v408, %v639
        %v641 = vpop.f32.mrb[0].mxu0
        %v642 = vadd.f32 %v412, %v641
        %v643 = vpop.f32.mrb[0].mxu0
        %v644 = vadd.f32 %v408, %v643
        %v645 = vpop.f32.mrb[0].mxu0
        %v646 = vadd.f32 %v412, %v645
        %647 = vmatprep.mubr.bf16.mxu0 %v348
        %648 = vmatmul.mubr.bf16.gmra.mrb[0].mxu0 %v347
        %v649 = vpop.f32.mrb[0].mxu0
        %v650 = vadd.f32 %v408, %v649
        %v651 = vpop.f32.mrb[0].mxu0
        %v652 = vadd.f32 %v412, %v651
        %v653 = vpop.f32.mrb[0].mxu0
        %v654 = vadd.f32 %v408, %v653
        %v655 = vpop.f32.mrb[0].mxu0
        %v656 = vadd.f32 %v412, %v655
        %657 = vmatprep.mubr.bf16.mxu0 %v350
        %658 = vmatmul.mubr.bf16.gmra.mrb[0].mxu0 %v349
        %v659 = vpop.f32.mrb[0].mxu0
        %v660 = vadd.f32 %v408, %v659
        %v661 = vpop.f32.mrb[0].mxu0
        %v662 = vadd.f32 %v412, %v661
        %v663 = vpop.f32.mrb[0].mxu0
        %v664 = vadd.f32 %v408, %v663
        %v665 = vpop.f32.mrb[0].mxu0
        %v666 = vadd.f32 %v412, %v665
        %667 = vmatprep.mubr.bf16.mxu0 %v352
        %668 = vmatmul.mubr.bf16.gmra.mrb[0].mxu0 %v351
        %v669 = vpop.f32.mrb[0].mxu0
        %v670 = vadd.f32 %v408, %v669
        %v671 = vpop.f32.mrb[0].mxu0
        %v672 = vadd.f32 %v412, %v671
        %v673 = vpop.f32.mrb[0].mxu0
        %v674 = vadd.f32 %v408, %v673
        %v675 = vpop.f32.mrb[0].mxu0
        %v676 = vadd.f32 %v412, %v675
        %677 = vmatprep.mubr.bf16.mxu0 %v354
        %678 = vmatmul.mubr.bf16.gmra.mrb[0].mxu0 %v353
        %v679 = vpop.f32.mrb[0].mxu0
        %v680 = vadd.f32 %v408, %v679
        %v681 = vpop.f32.mrb[0].mxu0
        %v682 = vadd.f32 %v412, %v681
        %v683 = vpop.f32.mrb[0].mxu0
        %v684 = vadd.f32 %v408, %v683
        %v685 = vpop.f32.mrb[0].mxu0
        %v686 = vadd.f32 %v412, %v685
        %687 = vmatprep.mubr.bf16.mxu0 %v356
        %688 = vmatmul.mubr.bf16.gmra.mrb[0].mxu0 %v355
        %v689 = vpop.f32.mrb[0].mxu0
        %v690 = vadd.f32 %v408, %v689
        %v691 = vpop.f32.mrb[0].mxu0
        %v692 = vadd.f32 %v412, %v691
        %v693 = vpop.f32.mrb[0].mxu0
        %v694 = vadd.f32 %v408, %v693
        %v695 = vpop.f32.mrb[0].mxu0
        %v696 = vadd.f32 %v412, %v695
        %697 = vmatprep.mubr.bf16.mxu0 %v358
        %698 = vmatmul.mubr.bf16.gmra.mrb[0].mxu0 %v357
        %v699 = vpop.f32.mrb[0].mxu0
        %v700 = vadd.f32 %v408, %v699
        %v701 = vpop.f32.mrb[0].mxu0
        %v702 = vadd.f32 %v412, %v701
        %v703 = vpop.f32.mrb[0].mxu0
        %v704 = vadd.f32 %v408, %v703
        %v705 = vpop.f32.mrb[0].mxu0
        %v706 = vadd.f32 %v412, %v705
        %707 = vmatprep.mubr.bf16.mxu0 %v360
        %708 = vmatmul.mubr.bf16.gmra.mrb[0].mxu0 %v359
        %v709 = vpop.f32.mrb[0].mxu0
        %v710 = vadd.f32 %v408, %v709
        %v711 = vpop.f32.mrb[0].mxu0
        %v712 = vadd.f32 %v412, %v711
        %v713 = vpop.f32.mrb[0].mxu0
        %v714 = vadd.f32 %v408, %v713
        %v715 = vpop.f32.mrb[0].mxu0
        %v716 = vadd.f32 %v412, %v715
        %717 = vmatprep.mubr.bf16.mxu0 %v362
        %718 = vmatmul.mubr.bf16.gmra.mrb[0].mxu0 %v361
        %v719 = vpop.f32.mrb[0].mxu0
        %v720 = vadd.f32 %v408, %v719
        %v721 = vpop.f32.mrb[0].mxu0
        %v722 = vadd.f32 %v412, %v721
        %v723 = vpop.f32.mrb[0].mxu0
        %v724 = vadd.f32 %v408, %v723
        %v725 = vpop.f32.mrb[0].mxu0
        %v726 = vadd.f32 %v412, %v725
        %727 = vmatprep.mubr.bf16.mxu0 %v364
        %728 = vmatmul.mubr.bf16.gmra.mrb[0].mxu0 %v363
        %v729 = vpop.f32.mrb[0].mxu0
        %v730 = vadd.f32 %v408, %v729
        %v731 = vpop.f32.mrb[0].mxu0
        %v732 = vadd.f32 %v412, %v731
        %v733 = vpop.f32.mrb[0].mxu0
        %v734 = vadd.f32 %v408, %v733
        %v735 = vpop.f32.mrb[0].mxu0
        %v736 = vadd.f32 %v412, %v735
        %737 = vmatprep.mubr.bf16.mxu0 %v366
        %738 = vmatmul.mubr.bf16.gmra.mrb[0].mxu0 %v365
        %v739 = vpop.f32.mrb[0].mxu0
        %v740 = vadd.f32 %v408, %v739
        %v741 = vpop.f32.mrb[0].mxu0
        %v742 = vadd.f32 %v412, %v741
        %v743 = vpop.f32.mrb[0].mxu0
        %v744 = vadd.f32 %v408, %v743
        %v745 = vpop.f32.mrb[0].mxu0
        %v746 = vadd.f32 %v412, %v745
        %747 = vmatprep.mubr.bf16.mxu0 %v368
        %748 = vmatmul.mubr.bf16.gmra.mrb[0].mxu0 %v367
        %v749 = vpop.f32.mrb[0].mxu0
        %v750 = vadd.f32 %v408, %v749
        %v751 = vpop.f32.mrb[0].mxu0
        %v752 = vadd.f32 %v412, %v751
        %v753 = vpop.f32.mrb[0].mxu0
        %v754 = vadd.f32 %v408, %v753
        %v755 = vpop.f32.mrb[0].mxu0
        %v756 = vadd.f32 %v412, %v755
        %757 = vmatprep.mubr.bf16.mxu0 %v370
        %758 = vmatmul.mubr.bf16.gmra.mrb[0].mxu0 %v369
        %v759 = vpop.f32.mrb[0].mxu0
        %v760 = vadd.f32 %v408, %v759
        %v761 = vpop.f32.mrb[0].mxu0
        %v762 = vadd.f32 %v412, %v761
        %v763 = vpop.f32.mrb[0].mxu0
        %v764 = vadd.f32 %v408, %v763
        %v765 = vpop.f32.mrb[0].mxu0
        %v766 = vadd.f32 %v412, %v765
        %767 = vdwg.mxu0
        %v768 = vmax.f32 %v610, 0.0
        %v769 = vmax.f32 %v612, 0.0
        %v770 = vmax.f32 %v614, 0.0
        %v771 = vmax.f32 %v616, 0.0
        %v772 = vmax.f32 %v620, 0.0
        %v773 = vmax.f32 %v622, 0.0
        %v774 = vmax.f32 %v624, 0.0
        %v775 = vmax.f32 %v626, 0.0
        %v776 = vmax.f32 %v630, 0.0
        %v777 = vmax.f32 %v632, 0.0
        %v778 = vmax.f32 %v634, 0.0
        %v779 = vmax.f32 %v636, 0.0
        %v780 = vmax.f32 %v640, 0.0
        %v781 = vmax.f32 %v642, 0.0
        %v782 = vmax.f32 %v644, 0.0
        %v783 = vmax.f32 %v646, 0.0
        %v784 = vmax.f32 %v650, 0.0
        %v785 = vmax.f32 %v652, 0.0
        %v786 = vmax.f32 %v654, 0.0
        %v787 = vmax.f32 %v656, 0.0
        %v788 = vmax.f32 %v660, 0.0
        %v789 = vmax.f32 %v662, 0.0
        %v790 = vmax.f32 %v664, 0.0
        %v791 = vmax.f32 %v666, 0.0
        %v792 = vmax.f32 %v670, 0.0
        %v793 = vmax.f32 %v672, 0.0
        %v794 = vmax.f32 %v674, 0.0
        %v795 = vmax.f32 %v676, 0.0
        %v796 = vmax.f32 %v680, 0.0
        %v797 = vmax.f32 %v682, 0.0
        %v798 = vmax.f32 %v684, 0.0
        %v799 = vmax.f32 %v686, 0.0
        %v800 = vmax.f32 %v690, 0.0
        %v801 = vmax.f32 %v692, 0.0
        %v802 = vmax.f32 %v694, 0.0
        %v803 = vmax.f32 %v696, 0.0
        %v804 = vmax.f32 %v700, 0.0
        %v805 = vmax.f32 %v702, 0.0
        %v806 = vmax.f32 %v704, 0.0
        %v807 = vmax.f32 %v706, 0.0
        %v808 = vmax.f32 %v710, 0.0
        %v809 = vmax.f32 %v712, 0.0
        %v810 = vmax.f32 %v714, 0.0
        %v811 = vmax.f32 %v716, 0.0
        %v812 = vmax.f32 %v720, 0.0
        %v813 = vmax.f32 %v722, 0.0
        %v814 = vmax.f32 %v724, 0.0
        %v815 = vmax.f32 %v726, 0.0
        %v816 = vmax.f32 %v730, 0.0
        %v817 = vmax.f32 %v732, 0.0
        %v818 = vmax.f32 %v734, 0.0
        %v819 = vmax.f32 %v736, 0.0
        %v820 = vmax.f32 %v740, 0.0
        %v821 = vmax.f32 %v742, 0.0
        %v822 = vmax.f32 %v744, 0.0
        %v823 = vmax.f32 %v746, 0.0
        %v824 = vmax.f32 %v750, 0.0
        %v825 = vmax.f32 %v752, 0.0
        %v826 = vmax.f32 %v754, 0.0
        %v827 = vmax.f32 %v756, 0.0
        %v828 = vmax.f32 %v760, 0.0
        %v829 = vmax.f32 %v762, 0.0
        %v830 = vmax.f32 %v764, 0.0
        %v831 = vmax.f32 %v766, 0.0
        %v832 = vpack.c.bf16 %v770, %v768
        %v833 = vpack.c.bf16 %v771, %v769
        %v834 = vpack.c.bf16 %v774, %v772
        %v835 = vpack.c.bf16 %v775, %v773
        %v836 = vpack.c.bf16 %v778, %v776
        %v837 = vpack.c.bf16 %v779, %v777
        %v838 = vpack.c.bf16 %v782, %v780
        %v839 = vpack.c.bf16 %v783, %v781
        %v840 = vpack.c.bf16 %v786, %v784
        %v841 = vpack.c.bf16 %v787, %v785
        %v842 = vpack.c.bf16 %v790, %v788
        %v843 = vpack.c.bf16 %v791, %v789
        %v844 = vpack.c.bf16 %v794, %v792
        %v845 = vpack.c.bf16 %v795, %v793
        %v846 = vpack.c.bf16 %v798, %v796
        %v847 = vpack.c.bf16 %v799, %v797
        %v848 = vpack.c.bf16 %v802, %v800
        %v849 = vpack.c.bf16 %v803, %v801
        %v850 = vpack.c.bf16 %v806, %v804
        %v851 = vpack.c.bf16 %v807, %v805
        %v852 = vpack.c.bf16 %v810, %v808
        %v853 = vpack.c.bf16 %v811, %v809
        %v854 = vpack.c.bf16 %v814, %v812
        %v855 = vpack.c.bf16 %v815, %v813
        %v856 = vpack.c.bf16 %v818, %v816
        %v857 = vpack.c.bf16 %v819, %v817
        %v858 = vpack.c.bf16 %v822, %v820
        %v859 = vpack.c.bf16 %v823, %v821
        %v860 = vpack.c.bf16 %v826, %v824
        %v861 = vpack.c.bf16 %v827, %v825
        %v862 = vpack.c.bf16 %v830, %v828
        %v863 = vpack.c.bf16 %v831, %v829
        %v864 = vld [vmem:[#allocation7] sm:$0xff]
        %v865 = vld [vmem:[#allocation7 + $0x8] sm:$0xff]
        %v866 = vld [vmem:[#allocation7 + $0x10] sm:$0xff]
        %v867 = vld [vmem:[#allocation7 + $0x18] sm:$0xff]
        %v868 = vld [vmem:[#allocation7 + $0x20] sm:$0xff]
        %v869 = vld [vmem:[#allocation7 + $0x28] sm:$0xff]
        %v870 = vld [vmem:[#allocation7 + $0x30] sm:$0xff]
        %v871 = vld [vmem:[#allocation7 + $0x38] sm:$0xff]
        %v872 = vld [vmem:[#allocation7 + $0x40] sm:$0xff]
        %v873 = vld [vmem:[#allocation7 + $0x48] sm:$0xff]
        %v874 = vld [vmem:[#allocation7 + $0x50] sm:$0xff]
        %v875 = vld [vmem:[#allocation7 + $0x58] sm:$0xff]
        %v876 = vld [vmem:[#allocation7 + $0x60] sm:$0xff]
        %v877 = vld [vmem:[#allocation7 + $0x68] sm:$0xff]
        %v878 = vld [vmem:[#allocation7 + $0x70] sm:$0xff]
        %v879 = vld [vmem:[#allocation7 + $0x78] sm:$0xff]
        %v880 = vld [vmem:[#allocation7 + $0x80] sm:$0xff]
        %v881 = vld [vmem:[#allocation7 + $0x88] sm:$0xff]
        %v882 = vld [vmem:[#allocation7 + $0x90] sm:$0xff]
        %v883 = vld [vmem:[#allocation7 + $0x98] sm:$0xff]
        %v884 = vld [vmem:[#allocation7 + $0xa0] sm:$0xff]
        %v885 = vld [vmem:[#allocation7 + $0xa8] sm:$0xff]
        %v886 = vld [vmem:[#allocation7 + $0xb0] sm:$0xff]
        %v887 = vld [vmem:[#allocation7 + $0xb8] sm:$0xff]
        %v888 = vld [vmem:[#allocation7 + $0xc0] sm:$0xff]
        %v889 = vld [vmem:[#allocation7 + $0xc8] sm:$0xff]
        %v890 = vld [vmem:[#allocation7 + $0xd0] sm:$0xff]
        %v891 = vld [vmem:[#allocation7 + $0xd8] sm:$0xff]
        %v892 = vld [vmem:[#allocation7 + $0xe0] sm:$0xff]
        %v893 = vld [vmem:[#allocation7 + $0xe8] sm:$0xff]
        %v894 = vld [vmem:[#allocation7 + $0xf0] sm:$0xff]
        %v895 = vld [vmem:[#allocation7 + $0xf8] sm:$0xff]
        %v896 = vld [vmem:[%s4] sm:$0x3]
        %v898 = vlaneseq
        %v899 = vshrl.u32 %v898, 7
        %v900 = vsub.s32 0, %v899
        %v901 = vrot.slane %v896, %v900
        %v902 = vlaneseq
        %v903 = vshrl.u32 %v902, 7
        %v904 = vsub.s32 1, %v903
        %v905 = vrot.slane %v896, %v904
        %v940 = vunpack.c.l.b16 %v864
        %v941 = vunpack.c.h.b16 %v864
        %v942 = vunpack.c.l.b16 %v865
        %v943 = vunpack.c.h.b16 %v865
        %v944 = vunpack.c.l.b16 %v866
        %v945 = vunpack.c.h.b16 %v866
        %v946 = vunpack.c.l.b16 %v867
        %v947 = vunpack.c.h.b16 %v867
        %v948 = vunpack.c.l.b16 %v868
        %v949 = vunpack.c.h.b16 %v868
        %v950 = vunpack.c.l.b16 %v869
        %v951 = vunpack.c.h.b16 %v869
        %v952 = vunpack.c.l.b16 %v870
        %v953 = vunpack.c.h.b16 %v870
        %v954 = vunpack.c.l.b16 %v871
        %v955 = vunpack.c.h.b16 %v871
        %v956 = vunpack.c.l.b16 %v872
        %v957 = vunpack.c.h.b16 %v872
        %v958 = vunpack.c.l.b16 %v873
        %v959 = vunpack.c.h.b16 %v873
        %v960 = vunpack.c.l.b16 %v874
        %v961 = vunpack.c.h.b16 %v874
        %v962 = vunpack.c.l.b16 %v875
        %v963 = vunpack.c.h.b16 %v875
        %v964 = vunpack.c.l.b16 %v876
        %v965 = vunpack.c.h.b16 %v876
        %v966 = vunpack.c.l.b16 %v877
        %v967 = vunpack.c.h.b16 %v877
        %v968 = vunpack.c.l.b16 %v878
        %v969 = vunpack.c.h.b16 %v878
        %v970 = vunpack.c.l.b16 %v879
        %v971 = vunpack.c.h.b16 %v879
        %v972 = vunpack.c.l.b16 %v880
        %v973 = vunpack.c.h.b16 %v880
        %v974 = vunpack.c.l.b16 %v881
        %v975 = vunpack.c.h.b16 %v881
        %v976 = vunpack.c.l.b16 %v882
        %v977 = vunpack.c.h.b16 %v882
        %v978 = vunpack.c.l.b16 %v883
        %v979 = vunpack.c.h.b16 %v883
        %v980 = vunpack.c.l.b16 %v884
        %v981 = vunpack.c.h.b16 %v884
        %v982 = vunpack.c.l.b16 %v885
        %v983 = vunpack.c.h.b16 %v885
        %v984 = vunpack.c.l.b16 %v886
        %v985 = vunpack.c.h.b16 %v886
        %v986 = vunpack.c.l.b16 %v887
        %v987 = vunpack.c.h.b16 %v887
        %v988 = vunpack.c.l.b16 %v888
        %v989 = vunpack.c.h.b16 %v888
        %v990 = vunpack.c.l.b16 %v889
        %v991 = vunpack.c.h.b16 %v889
        %v992 = vunpack.c.l.b16 %v890
        %v993 = vunpack.c.h.b16 %v890
        %v994 = vunpack.c.l.b16 %v891
        %v995 = vunpack.c.h.b16 %v891
        %v996 = vunpack.c.l.b16 %v892
        %v997 = vunpack.c.h.b16 %v892
        %v998 = vunpack.c.l.b16 %v893
        %v999 = vunpack.c.h.b16 %v893
        %v1000 = vunpack.c.l.b16 %v894
        %v1001 = vunpack.c.h.b16 %v894
        %v1002 = vunpack.c.l.b16 %v895
        %v1003 = vunpack.c.h.b16 %v895
        %v1004 = vpack.c.b16 %v942, %v940
        %v1005 = vpack.c.b16 %v943, %v941
        %v1006 = vpack.c.b16 %v946, %v944
        %v1007 = vpack.c.b16 %v947, %v945
        %v1008 = vpack.c.b16 %v950, %v948
        %v1009 = vpack.c.b16 %v951, %v949
        %v1010 = vpack.c.b16 %v954, %v952
        %v1011 = vpack.c.b16 %v955, %v953
        %v1012 = vpack.c.b16 %v958, %v956
        %v1013 = vpack.c.b16 %v959, %v957
        %v1014 = vpack.c.b16 %v962, %v960
        %v1015 = vpack.c.b16 %v963, %v961
        %v1016 = vpack.c.b16 %v966, %v964
        %v1017 = vpack.c.b16 %v967, %v965
        %v1018 = vpack.c.b16 %v970, %v968
        %v1019 = vpack.c.b16 %v971, %v969
        %v1020 = vpack.c.b16 %v974, %v972
        %v1021 = vpack.c.b16 %v975, %v973
        %v1022 = vpack.c.b16 %v978, %v976
        %v1023 = vpack.c.b16 %v979, %v977
        %v1024 = vpack.c.b16 %v982, %v980
        %v1025 = vpack.c.b16 %v983, %v981
        %v1026 = vpack.c.b16 %v986, %v984
        %v1027 = vpack.c.b16 %v987, %v985
        %v1028 = vpack.c.b16 %v990, %v988
        %v1029 = vpack.c.b16 %v991, %v989
        %v1030 = vpack.c.b16 %v994, %v992
        %v1031 = vpack.c.b16 %v995, %v993
        %v1032 = vpack.c.b16 %v998, %v996
        %v1033 = vpack.c.b16 %v999, %v997
        %v1034 = vpack.c.b16 %v1002, %v1000
        %v1035 = vpack.c.b16 %v1003, %v1001
        %1068 = vmatprep.subr.bf16.mxu0 %v1005
        %1069 = vmatpush1.bf16.msra.mxu0 %v1004
        %1070 = vmatprep.subr.bf16.mxu0 %v1007
        %1071 = vmatpush1.bf16.msra.mxu0 %v1006
        %1072 = vmatprep.subr.bf16.mxu0 %v1009
        %1073 = vmatpush1.bf16.msra.mxu0 %v1008
        %1074 = vmatprep.subr.bf16.mxu0 %v1011
        %1075 = vmatpush1.bf16.msra.mxu0 %v1010
        %1076 = vmatprep.subr.bf16.mxu0 %v1013
        %1077 = vmatpush1.bf16.msra.mxu0 %v1012
        %1078 = vmatprep.subr.bf16.mxu0 %v1015
        %1079 = vmatpush1.bf16.msra.mxu0 %v1014
        %1080 = vmatprep.subr.bf16.mxu0 %v1017
        %1081 = vmatpush1.bf16.msra.mxu0 %v1016
        %1082 = vmatprep.subr.bf16.mxu0 %v1019
        %1083 = vmatpush1.bf16.msra.mxu0 %v1018
        %1084 = vmatprep.subr.bf16.mxu0 %v1021
        %1085 = vmatpush1.bf16.msra.mxu0 %v1020
        %1086 = vmatprep.subr.bf16.mxu0 %v1023
        %1087 = vmatpush1.bf16.msra.mxu0 %v1022
        %1088 = vmatprep.subr.bf16.mxu0 %v1025
        %1089 = vmatpush1.bf16.msra.mxu0 %v1024
        %1090 = vmatprep.subr.bf16.mxu0 %v1027
        %1091 = vmatpush1.bf16.msra.mxu0 %v1026
        %1092 = vmatprep.subr.bf16.mxu0 %v1029
        %1093 = vmatpush1.bf16.msra.mxu0 %v1028
        %1094 = vmatprep.subr.bf16.mxu0 %v1031
        %1095 = vmatpush1.bf16.msra.mxu0 %v1030
        %1096 = vmatprep.subr.bf16.mxu0 %v1033
        %1097 = vmatpush1.bf16.msra.mxu0 %v1032
        %1098 = vmatprep.subr.bf16.mxu0 %v1035
        %1099 = vmatpush1.bf16.msra.mxu0 %v1034
        %1100 = vmatprep.mubr.bf16.mxu0 %v833
        %1101 = vmatmul.mubr.bf16.gmra.mrb[0].mxu0 %v832
        %v1102 = vpop.f32.mrb[0].mxu0
        %v1103 = vadd.f32 %v901, %v1102
        %v1104 = vpop.f32.mrb[0].mxu0
        %v1105 = vadd.f32 %v905, %v1104
        %v1106 = vpop.f32.mrb[0].mxu0
        %v1107 = vadd.f32 %v901, %v1106
        %v1108 = vpop.f32.mrb[0].mxu0
        %v1109 = vadd.f32 %v905, %v1108
        %1110 = vmatprep.mubr.bf16.mxu0 %v835
        %1111 = vmatmul.mubr.bf16.gmra.mrb[0].mxu0 %v834
        %v1112 = vpop.f32.mrb[0].mxu0
        %v1113 = vadd.f32 %v901, %v1112
        %v1114 = vpop.f32.mrb[0].mxu0
        %v1115 = vadd.f32 %v905, %v1114
        %v1116 = vpop.f32.mrb[0].mxu0
        %v1117 = vadd.f32 %v901, %v1116
        %v1118 = vpop.f32.mrb[0].mxu0
        %v1119 = vadd.f32 %v905, %v1118
        %1120 = vmatprep.mubr.bf16.mxu0 %v837
        %1121 = vmatmul.mubr.bf16.gmra.mrb[0].mxu0 %v836
        %v1122 = vpop.f32.mrb[0].mxu0
        %v1123 = vadd.f32 %v901, %v1122
        %v1124 = vpop.f32.mrb[0].mxu0
        %v1125 = vadd.f32 %v905, %v1124
        %v1126 = vpop.f32.mrb[0].mxu0
        %v1127 = vadd.f32 %v901, %v1126
        %v1128 = vpop.f32.mrb[0].mxu0
        %v1129 = vadd.f32 %v905, %v1128
        %1130 = vmatprep.mubr.bf16.mxu0 %v839
        %1131 = vmatmul.mubr.bf16.gmra.mrb[0].mxu0 %v838
        %v1132 = vpop.f32.mrb[0].mxu0
        %v1133 = vadd.f32 %v901, %v1132
        %v1134 = vpop.f32.mrb[0].mxu0
        %v1135 = vadd.f32 %v905, %v1134
        %v1136 = vpop.f32.mrb[0].mxu0
        %v1137 = vadd.f32 %v901, %v1136
        %v1138 = vpop.f32.mrb[0].mxu0
        %v1139 = vadd.f32 %v905, %v1138
        %1140 = vmatprep.mubr.bf16.mxu0 %v841
        %1141 = vmatmul.mubr.bf16.gmra.mrb[0].mxu0 %v840
        %v1142 = vpop.f32.mrb[0].mxu0
        %v1143 = vadd.f32 %v901, %v1142
        %v1144 = vpop.f32.mrb[0].mxu0
        %v1145 = vadd.f32 %v905, %v1144
        %v1146 = vpop.f32.mrb[0].mxu0
        %v1147 = vadd.f32 %v901, %v1146
        %v1148 = vpop.f32.mrb[0].mxu0
        %v1149 = vadd.f32 %v905, %v1148
        %1150 = vmatprep.mubr.bf16.mxu0 %v843
        %1151 = vmatmul.mubr.bf16.gmra.mrb[0].mxu0 %v842
        %v1152 = vpop.f32.mrb[0].mxu0
        %v1153 = vadd.f32 %v901, %v1152
        %v1154 = vpop.f32.mrb[0].mxu0
        %v1155 = vadd.f32 %v905, %v1154
        %v1156 = vpop.f32.mrb[0].mxu0
        %v1157 = vadd.f32 %v901, %v1156
        %v1158 = vpop.f32.mrb[0].mxu0
        %v1159 = vadd.f32 %v905, %v1158
        %1160 = vmatprep.mubr.bf16.mxu0 %v845
        %1161 = vmatmul.mubr.bf16.gmra.mrb[0].mxu0 %v844
        %v1162 = vpop.f32.mrb[0].mxu0
        %v1163 = vadd.f32 %v901, %v1162
        %v1164 = vpop.f32.mrb[0].mxu0
        %v1165 = vadd.f32 %v905, %v1164
        %v1166 = vpop.f32.mrb[0].mxu0
        %v1167 = vadd.f32 %v901, %v1166
        %v1168 = vpop.f32.mrb[0].mxu0
        %v1169 = vadd.f32 %v905, %v1168
        %1170 = vmatprep.mubr.bf16.mxu0 %v847
        %1171 = vmatmul.mubr.bf16.gmra.mrb[0].mxu0 %v846
        %v1172 = vpop.f32.mrb[0].mxu0
        %v1173 = vadd.f32 %v901, %v1172
        %v1174 = vpop.f32.mrb[0].mxu0
        %v1175 = vadd.f32 %v905, %v1174
        %v1176 = vpop.f32.mrb[0].mxu0
        %v1177 = vadd.f32 %v901, %v1176
        %v1178 = vpop.f32.mrb[0].mxu0
        %v1179 = vadd.f32 %v905, %v1178
        %1180 = vmatprep.mubr.bf16.mxu0 %v849
        %1181 = vmatmul.mubr.bf16.gmra.mrb[0].mxu0 %v848
        %v1182 = vpop.f32.mrb[0].mxu0
        %v1183 = vadd.f32 %v901, %v1182
        %v1184 = vpop.f32.mrb[0].mxu0
        %v1185 = vadd.f32 %v905, %v1184
        %v1186 = vpop.f32.mrb[0].mxu0
        %v1187 = vadd.f32 %v901, %v1186
        %v1188 = vpop.f32.mrb[0].mxu0
        %v1189 = vadd.f32 %v905, %v1188
        %1190 = vmatprep.mubr.bf16.mxu0 %v851
        %1191 = vmatmul.mubr.bf16.gmra.mrb[0].mxu0 %v850
        %v1192 = vpop.f32.mrb[0].mxu0
        %v1193 = vadd.f32 %v901, %v1192
        %v1194 = vpop.f32.mrb[0].mxu0
        %v1195 = vadd.f32 %v905, %v1194
        %v1196 = vpop.f32.mrb[0].mxu0
        %v1197 = vadd.f32 %v901, %v1196
        %v1198 = vpop.f32.mrb[0].mxu0
        %v1199 = vadd.f32 %v905, %v1198
        %1200 = vmatprep.mubr.bf16.mxu0 %v853
        %1201 = vmatmul.mubr.bf16.gmra.mrb[0].mxu0 %v852
        %v1202 = vpop.f32.mrb[0].mxu0
        %v1203 = vadd.f32 %v901, %v1202
        %v1204 = vpop.f32.mrb[0].mxu0
        %v1205 = vadd.f32 %v905, %v1204
        %v1206 = vpop.f32.mrb[0].mxu0
        %v1207 = vadd.f32 %v901, %v1206
        %v1208 = vpop.f32.mrb[0].mxu0
        %v1209 = vadd.f32 %v905, %v1208
        %1210 = vmatprep.mubr.bf16.mxu0 %v855
        %1211 = vmatmul.mubr.bf16.gmra.mrb[0].mxu0 %v854
        %v1212 = vpop.f32.mrb[0].mxu0
        %v1213 = vadd.f32 %v901, %v1212
        %v1214 = vpop.f32.mrb[0].mxu0
        %v1215 = vadd.f32 %v905, %v1214
        %v1216 = vpop.f32.mrb[0].mxu0
        %v1217 = vadd.f32 %v901, %v1216
        %v1218 = vpop.f32.mrb[0].mxu0
        %v1219 = vadd.f32 %v905, %v1218
        %1220 = vmatprep.mubr.bf16.mxu0 %v857
        %1221 = vmatmul.mubr.bf16.gmra.mrb[0].mxu0 %v856
        %v1222 = vpop.f32.mrb[0].mxu0
        %v1223 = vadd.f32 %v901, %v1222
        %v1224 = vpop.f32.mrb[0].mxu0
        %v1225 = vadd.f32 %v905, %v1224
        %v1226 = vpop.f32.mrb[0].mxu0
        %v1227 = vadd.f32 %v901, %v1226
        %v1228 = vpop.f32.mrb[0].mxu0
        %v1229 = vadd.f32 %v905, %v1228
        %1230 = vmatprep.mubr.bf16.mxu0 %v859
        %1231 = vmatmul.mubr.bf16.gmra.mrb[0].mxu0 %v858
        %v1232 = vpop.f32.mrb[0].mxu0
        %v1233 = vadd.f32 %v901, %v1232
        %v1234 = vpop.f32.mrb[0].mxu0
        %v1235 = vadd.f32 %v905, %v1234
        %v1236 = vpop.f32.mrb[0].mxu0
        %v1237 = vadd.f32 %v901, %v1236
        %v1238 = vpop.f32.mrb[0].mxu0
        %v1239 = vadd.f32 %v905, %v1238
        %1240 = vmatprep.mubr.bf16.mxu0 %v861
        %1241 = vmatmul.mubr.bf16.gmra.mrb[0].mxu0 %v860
        %v1242 = vpop.f32.mrb[0].mxu0
        %v1243 = vadd.f32 %v901, %v1242
        %v1244 = vpop.f32.mrb[0].mxu0
        %v1245 = vadd.f32 %v905, %v1244
        %v1246 = vpop.f32.mrb[0].mxu0
        %v1247 = vadd.f32 %v901, %v1246
        %v1248 = vpop.f32.mrb[0].mxu0
        %v1249 = vadd.f32 %v905, %v1248
        %1250 = vmatprep.mubr.bf16.mxu0 %v863
        %1251 = vmatmul.mubr.bf16.gmra.mrb[0].mxu0 %v862
        %v1252 = vpop.f32.mrb[0].mxu0
        %v1253 = vadd.f32 %v901, %v1252
        %v1254 = vpop.f32.mrb[0].mxu0
        %v1255 = vadd.f32 %v905, %v1254
        %v1256 = vpop.f32.mrb[0].mxu0
        %v1257 = vadd.f32 %v901, %v1256
        %v1258 = vpop.f32.mrb[0].mxu0
        %v1259 = vadd.f32 %v905, %v1258
        %1260 = vdwg.mxu0
        %v1261 = vadd.f32 %v1103, %v275
        %v1262 = vadd.f32 %v1105, %v276
        %v1263 = vadd.f32 %v1107, %v277
        %v1264 = vadd.f32 %v1109, %v278
        %v1265 = vadd.f32 %v1113, %v279
        %v1266 = vadd.f32 %v1115, %v280
        %v1267 = vadd.f32 %v1117, %v281
        %v1268 = vadd.f32 %v1119, %v282
        %v1269 = vadd.f32 %v1123, %v283
        %v1270 = vadd.f32 %v1125, %v284
        %v1271 = vadd.f32 %v1127, %v285
        %v1272 = vadd.f32 %v1129, %v286
        %v1273 = vadd.f32 %v1133, %v287
        %v1274 = vadd.f32 %v1135, %v288
        %v1275 = vadd.f32 %v1137, %v289
        %v1276 = vadd.f32 %v1139, %v290
        %v1277 = vadd.f32 %v1143, %v291
        %v1278 = vadd.f32 %v1145, %v292
        %v1279 = vadd.f32 %v1147, %v293
        %v1280 = vadd.f32 %v1149, %v294
        %v1281 = vadd.f32 %v1153, %v295
        %v1282 = vadd.f32 %v1155, %v296
        %v1283 = vadd.f32 %v1157, %v297
        %v1284 = vadd.f32 %v1159, %v298
        %v1285 = vadd.f32 %v1163, %v299
        %v1286 = vadd.f32 %v1165, %v300
        %v1287 = vadd.f32 %v1167, %v301
        %v1288 = vadd.f32 %v1169, %v302
        %v1289 = vadd.f32 %v1173, %v303
        %v1290 = vadd.f32 %v1175, %v304
        %v1291 = vadd.f32 %v1177, %v305
        %v1292 = vadd.f32 %v1179, %v306
        %v1293 = vadd.f32 %v1183, %v307
        %v1294 = vadd.f32 %v1185, %v308
        %v1295 = vadd.f32 %v1187, %v309
        %v1296 = vadd.f32 %v1189, %v310
        %v1297 = vadd.f32 %v1193, %v311
        %v1298 = vadd.f32 %v1195, %v312
        %v1299 = vadd.f32 %v1197, %v313
        %v1300 = vadd.f32 %v1199, %v314
        %v1301 = vadd.f32 %v1203, %v315
        %v1302 = vadd.f32 %v1205, %v316
        %v1303 = vadd.f32 %v1207, %v317
        %v1304 = vadd.f32 %v1209, %v318
        %v1305 = vadd.f32 %v1213, %v319
        %v1306 = vadd.f32 %v1215, %v320
        %v1307 = vadd.f32 %v1217, %v321
        %v1308 = vadd.f32 %v1219, %v322
        %v1309 = vadd.f32 %v1223, %v323
        %v1310 = vadd.f32 %v1225, %v324
        %v1311 = vadd.f32 %v1227, %v325
        %v1312 = vadd.f32 %v1229, %v326
        %v1313 = vadd.f32 %v1233, %v327
        %v1314 = vadd.f32 %v1235, %v328
        %v1315 = vadd.f32 %v1237, %v329
        %v1316 = vadd.f32 %v1239, %v330
        %v1317 = vadd.f32 %v1243, %v331
        %v1318 = vadd.f32 %v1245, %v332
        %v1319 = vadd.f32 %v1247, %v333
        %v1320 = vadd.f32 %v1249, %v334
        %v1321 = vadd.f32 %v1253, %v335
        %v1322 = vadd.f32 %v1255, %v336
        %v1323 = vadd.f32 %v1257, %v337
        %v1324 = vadd.f32 %v1259, %v338
        %v1325 = vmax.f32 %v1261, 0.0
        %v1326 = vmax.f32 %v1262, 0.0
        %v1327 = vmax.f32 %v1263, 0.0
        %v1328 = vmax.f32 %v1264, 0.0
        %v1329 = vmax.f32 %v1265, 0.0
        %v1330 = vmax.f32 %v1266, 0.0
        %v1331 = vmax.f32 %v1267, 0.0
        %v1332 = vmax.f32 %v1268, 0.0
        %v1333 = vmax.f32 %v1269, 0.0
        %v1334 = vmax.f32 %v1270, 0.0
        %v1335 = vmax.f32 %v1271, 0.0
        %v1336 = vmax.f32 %v1272, 0.0
        %v1337 = vmax.f32 %v1273, 0.0
        %v1338 = vmax.f32 %v1274, 0.0
        %v1339 = vmax.f32 %v1275, 0.0
        %v1340 = vmax.f32 %v1276, 0.0
        %v1341 = vmax.f32 %v1277, 0.0
        %v1342 = vmax.f32 %v1278, 0.0
        %v1343 = vmax.f32 %v1279, 0.0
        %v1344 = vmax.f32 %v1280, 0.0
        %v1345 = vmax.f32 %v1281, 0.0
        %v1346 = vmax.f32 %v1282, 0.0
        %v1347 = vmax.f32 %v1283, 0.0
        %v1348 = vmax.f32 %v1284, 0.0
        %v1349 = vmax.f32 %v1285, 0.0
        %v1350 = vmax.f32 %v1286, 0.0
        %v1351 = vmax.f32 %v1287, 0.0
        %v1352 = vmax.f32 %v1288, 0.0
        %v1353 = vmax.f32 %v1289, 0.0
        %v1354 = vmax.f32 %v1290, 0.0
        %v1355 = vmax.f32 %v1291, 0.0
        %v1356 = vmax.f32 %v1292, 0.0
        %v1357 = vmax.f32 %v1293, 0.0
        %v1358 = vmax.f32 %v1294, 0.0
        %v1359 = vmax.f32 %v1295, 0.0
        %v1360 = vmax.f32 %v1296, 0.0
        %v1361 = vmax.f32 %v1297, 0.0
        %v1362 = vmax.f32 %v1298, 0.0
        %v1363 = vmax.f32 %v1299, 0.0
        %v1364 = vmax.f32 %v1300, 0.0
        %v1365 = vmax.f32 %v1301, 0.0
        %v1366 = vmax.f32 %v1302, 0.0
        %v1367 = vmax.f32 %v1303, 0.0
        %v1368 = vmax.f32 %v1304, 0.0
        %v1369 = vmax.f32 %v1305, 0.0
        %v1370 = vmax.f32 %v1306, 0.0
        %v1371 = vmax.f32 %v1307, 0.0
        %v1372 = vmax.f32 %v1308, 0.0
        %v1373 = vmax.f32 %v1309, 0.0
        %v1374 = vmax.f32 %v1310, 0.0
        %v1375 = vmax.f32 %v1311, 0.0
        %v1376 = vmax.f32 %v1312, 0.0
        %v1377 = vmax.f32 %v1313, 0.0
        %v1378 = vmax.f32 %v1314, 0.0
        %v1379 = vmax.f32 %v1315, 0.0
        %v1380 = vmax.f32 %v1316, 0.0
        %v1381 = vmax.f32 %v1317, 0.0
        %v1382 = vmax.f32 %v1318, 0.0
        %v1383 = vmax.f32 %v1319, 0.0
        %v1384 = vmax.f32 %v1320, 0.0
        %v1385 = vmax.f32 %v1321, 0.0
        %v1386 = vmax.f32 %v1322, 0.0
        %v1387 = vmax.f32 %v1323, 0.0
        %v1388 = vmax.f32 %v1324, 0.0
        %1389 = vst [vmem:[%s272] sm:$0xff] %v1325
        %1390 = vst [vmem:[%s272 + $0x8] sm:$0xff] %v1326
        %1391 = vst [vmem:[%s272 + $0x10] sm:$0xff] %v1327
        %1392 = vst [vmem:[%s272 + $0x18] sm:$0xff] %v1328
        %1393 = vst [vmem:[%s272 + $0x20] sm:$0xff] %v1329
        %1394 = vst [vmem:[%s272 + $0x28] sm:$0xff] %v1330
        %1395 = vst [vmem:[%s272 + $0x30] sm:$0xff] %v1331
        %1396 = vst [vmem:[%s272 + $0x38] sm:$0xff] %v1332
        %1397 = vst [vmem:[%s272 + $0x40] sm:$0xff] %v1333
        %1398 = vst [vmem:[%s272 + $0x48] sm:$0xff] %v1334
        %1399 = vst [vmem:[%s272 + $0x50] sm:$0xff] %v1335
        %1400 = vst [vmem:[%s272 + $0x58] sm:$0xff] %v1336
        %1401 = vst [vmem:[%s272 + $0x60] sm:$0xff] %v1337
        %1402 = vst [vmem:[%s272 + $0x68] sm:$0xff] %v1338
        %1403 = vst [vmem:[%s272 + $0x70] sm:$0xff] %v1339
        %1404 = vst [vmem:[%s272 + $0x78] sm:$0xff] %v1340
        %1405 = vst [vmem:[%s272 + $0x80] sm:$0xff] %v1341
        %1406 = vst [vmem:[%s272 + $0x88] sm:$0xff] %v1342
        %1407 = vst [vmem:[%s272 + $0x90] sm:$0xff] %v1343
        %1408 = vst [vmem:[%s272 + $0x98] sm:$0xff] %v1344
        %1409 = vst [vmem:[%s272 + $0xa0] sm:$0xff] %v1345
        %1410 = vst [vmem:[%s272 + $0xa8] sm:$0xff] %v1346
        %1411 = vst [vmem:[%s272 + $0xb0] sm:$0xff] %v1347
        %1412 = vst [vmem:[%s272 + $0xb8] sm:$0xff] %v1348
        %1413 = vst [vmem:[%s272 + $0xc0] sm:$0xff] %v1349
        %1414 = vst [vmem:[%s272 + $0xc8] sm:$0xff] %v1350
        %1415 = vst [vmem:[%s272 + $0xd0] sm:$0xff] %v1351
        %1416 = vst [vmem:[%s272 + $0xd8] sm:$0xff] %v1352
        %1417 = vst [vmem:[%s272 + $0xe0] sm:$0xff] %v1353
        %1418 = vst [vmem:[%s272 + $0xe8] sm:$0xff] %v1354
        %1419 = vst [vmem:[%s272 + $0xf0] sm:$0xff] %v1355
        %1420 = vst [vmem:[%s272 + $0xf8] sm:$0xff] %v1356
        %1421 = vst [vmem:[%s272 + $0x100] sm:$0xff] %v1357
        %1422 = vst [vmem:[%s272 + $0x108] sm:$0xff] %v1358
        %1423 = vst [vmem:[%s272 + $0x110] sm:$0xff] %v1359
        %1424 = vst [vmem:[%s272 + $0x118] sm:$0xff] %v1360
        %1425 = vst [vmem:[%s272 + $0x120] sm:$0xff] %v1361
        %1426 = vst [vmem:[%s272 + $0x128] sm:$0xff] %v1362
        %1427 = vst [vmem:[%s272 + $0x130] sm:$0xff] %v1363
        %1428 = vst [vmem:[%s272 + $0x138] sm:$0xff] %v1364
        %1429 = vst [vmem:[%s272 + $0x140] sm:$0xff] %v1365
        %1430 = vst [vmem:[%s272 + $0x148] sm:$0xff] %v1366
        %1431 = vst [vmem:[%s272 + $0x150] sm:$0xff] %v1367
        %1432 = vst [vmem:[%s272 + $0x158] sm:$0xff] %v1368
        %1433 = vst [vmem:[%s272 + $0x160] sm:$0xff] %v1369
        %1434 = vst [vmem:[%s272 + $0x168] sm:$0xff] %v1370
        %1435 = vst [vmem:[%s272 + $0x170] sm:$0xff] %v1371
        %1436 = vst [vmem:[%s272 + $0x178] sm:$0xff] %v1372
        %1437 = vst [vmem:[%s272 + $0x180] sm:$0xff] %v1373
        %1438 = vst [vmem:[%s272 + $0x188] sm:$0xff] %v1374
        %1439 = vst [vmem:[%s272 + $0x190] sm:$0xff] %v1375
        %1440 = vst [vmem:[%s272 + $0x198] sm:$0xff] %v1376
        %1441 = vst [vmem:[%s272 + $0x1a0] sm:$0xff] %v1377
        %1442 = vst [vmem:[%s272 + $0x1a8] sm:$0xff] %v1378
        %1443 = vst [vmem:[%s272 + $0x1b0] sm:$0xff] %v1379
        %1444 = vst [vmem:[%s272 + $0x1b8] sm:$0xff] %v1380
        %1445 = vst [vmem:[%s272 + $0x1c0] sm:$0xff] %v1381
        %1446 = vst [vmem:[%s272 + $0x1c8] sm:$0xff] %v1382
        %1447 = vst [vmem:[%s272 + $0x1d0] sm:$0xff] %v1383
        %1448 = vst [vmem:[%s272 + $0x1d8] sm:$0xff] %v1384
        %1449 = vst [vmem:[%s272 + $0x1e0] sm:$0xff] %v1385
        %1450 = vst [vmem:[%s272 + $0x1e8] sm:$0xff] %v1386
        %1451 = vst [vmem:[%s272 + $0x1f0] sm:$0xff] %v1387
        %1452 = vst [vmem:[%s272 + $0x1f8] sm:$0xff] %v1388
        %s1453 = sand.u32 %s141, 1
        %s1454 = scalar_lea.sflag [#allocation4], %s1453
        %s1455 = sand.u32 %s141, 1
        %s1456 = smul.addr %s1455, 512
        %s1457 = scalar_lea.vmem [#allocation8], %s1456
        // Predicated region
        $region53: #{_residual_block.1} parent=39 // pred_check
          %p1458 = pneg %p151
        $region54: #{_residual_block.1} parent=39 // pred_check_branch
          %1460 = sbr.rel (%p1458) target = $region56
        $region55: #{_residual_block.1} parent=39 // pred_region
          %s1461 = smul.u32 32, %s23
          %s1463 = ssub.s32 8192, 8192
          %1464 = vsyncadd %s1454, %s1463
          %s1465 = smul.addr %s1461, 2
          %s1466 = smul.addr %s1465, 128
          %s1467 = scalar_lea.hbm %s5, %s1466
          %s1468 = sshll.u32 %s1457, 4
          %s1469 = int_to_ptr.vmem [resolvable:$true] %s1468
          %1474 = dma.vmem_to_hbm [thread:$0]  %s1469, 8192, %s1467, %s1454, 256, 256, 16
        $region56: #{_residual_block.1} parent=39 // pred_fallthru
          _
      $region40: #{_residual_block.1} parent=5 // pred_fallthru
        _
      %p1475 = scmp.le.s32.totalorder 2, %s18
      // Predicated region
      $region57: #{_residual_block.1} parent=5 // pred_check
        %p1476 = pneg %p1475
      $region58: #{_residual_block.1} parent=5 // pred_check_branch
        %1478 = sbr.rel (%p1476) target = $region60
      $region59: #{_residual_block.1} parent=5 // pred_region
        %s1479 = ssub.s32 %s18, 2
        // Predicated region
        $region61: #{_residual_block.1} parent=59 // pred_check
          %p1480 = pneg %p157
        $region62: #{_residual_block.1} parent=59 // pred_check_branch
          %1482 = sbr.rel (%p1480) target = $region64
        $region63: #{_residual_block.1} parent=59 // pred_region
          %s1483 = sand.u32 %s142, 1
          %s1484 = scalar_lea.sflag [#allocation4], %s1483
          %s1485 = sand.u32 %s142, 1
          %s1486 = smul.addr %s1485, 512
          %s1487 = scalar_lea.vmem [#allocation8], %s1486
          %1488 = dma.done %s1484, 8192
        $region64: #{_residual_block.1} parent=59 // pred_fallthru
          _
      $region60: #{_residual_block.1} parent=5 // pred_fallthru
        _
    $region6: #{_residual_block.1} parent=1 // loop_footer
      %s22 = sadd.s32 1, %s18
    $region7: #{_residual_block.1} parent=1 // loop_footer_branch
      %17 = sbr.rel target = $region3
    $region8: #{_residual_block.1} parent=1 // loop_exit
      _
    %1489 = vsyncpa [#allocation3], 1
    %s1490 = scalar_lea.sflag [#allocation3], 1
    %1491 = vsyncpa %s1490, 1
    %1492 = vsyncpa [#allocation6], 1
    %1493 = vsyncpa [#allocation4], 1
    %s1494 = scalar_lea.sflag [#allocation4], 1
    %1495 = vsyncpa %s1494, 1

</llo_original>
